<compile_context>
chip_gen: v6e
topology: v6e:2x2x1
jax: 0.10.0
libtpu: 0.0.40
codegen_flags: <defaults>
</compile_context>

<pallas_src>
import functools

import jax
import jax.numpy as jnp
from jax import lax
from jax.experimental import pallas as pl
from jax.experimental.pallas import tpu as pltpu


def _round_up(n, m):
    return ((n + m - 1) // m) * m


def _lstm_mlp_kernel(x_ref, wih_ref, b_ref, whh_ref,
                     w1_ref, b1_ref, w2_ref, b2_ref, w3_ref, b3_ref,
                     out_ref, gx_scr, *, seq_len, batch_pad, gate_stride):
    """Single-invocation kernel: full LSTM recurrence + MLP head.

    Layout (S = gate_stride, Gp = 4*S; packed: S=32 -> Gp=128):
      x_ref   : (T*Bp, Ip)  (time-major, batch padded to sublane multiple)
      wih_ref : (Ip, Gp)    gate order i|f|g|o, each gate in its own S lanes
      b_ref   : (1, Gp)     b_ih + b_hh, same gate layout (f32)
      whh_ref : (S, Gp)
      w1_ref  : (S, Fp),  b1_ref: (1, Fp)
      w2_ref  : (Fp, Fp), b2_ref: (1, Fp)
      w3_ref  : (Fp, Op), b3_ref: (1, Op)
      out_ref : (Bp, Op)
      gx_scr  : (T*Bp, Gp) f32 scratch (precomputed input projection)
    """
    T, Bp, S = seq_len, batch_pad, gate_stride
    Gp = 4 * S
    mdt = whh_ref.dtype          # MXU operand dtype (f32, or bf16 on v6e/v7x)

    # ---- Hoisted input projection: one big MXU matmul, LSTM bias folded in.
    gx_scr[...] = (
        jnp.dot(x_ref[...], wih_ref[...], preferred_element_type=jnp.float32)
        + b_ref[...])

    w_hh = whh_ref[...]

    # Single-EUP-tanh gate activation over the whole Gp-lane gate slab:
    #   non-g lanes: sigmoid(z) = 0.5 * tanh(0.5 * z) + 0.5
    #   g lanes    : tanh(z)
    # i.e. act = sc * tanh(sc * z) + sh with lane-masked sc/sh (hoisted).
    lane = lax.broadcasted_iota(jnp.int32, (Bp, Gp), 1)
    is_g = (lane >= 2 * S) & (lane < 3 * S)
    sc = jnp.where(is_g, jnp.float32(1.0), jnp.float32(0.5))
    sh = jnp.where(is_g, jnp.float32(0.0), jnp.float32(0.5))

    def step(t, carry):
        h, c = carry
        start = t * Bp
        if not isinstance(start, int):          # dynamic (fori_loop) path
            start = pl.multiple_of(start, Bp)
        gx_t = gx_scr[pl.ds(start, Bp), :]                        # (Bp, Gp)
        gates = gx_t + jnp.dot(h.astype(mdt), w_hh,
                               preferred_element_type=jnp.float32)
        act = sc * jnp.tanh(sc * gates) + sh
        # Gate views (PyTorch order i, f, g, o); S-lane slices within the
        # packed block -> compiler-generated lane shifts/selects (XLU/VPU).
        i_g = act[:, 0 * S:1 * S]
        f_g = act[:, 1 * S:2 * S]
        g_g = act[:, 2 * S:3 * S]
        o_g = act[:, 3 * S:4 * S]
        c = f_g * c + i_g * g_g
        h = o_g * jnp.tanh(c)
        return h, c

    # ---- LSTM recurrence: state lives in vregs (no per-step VMEM round trip).
    h = jnp.zeros((Bp, S), jnp.float32)
    c = jnp.zeros((Bp, S), jnp.float32)
    if T <= 16:
        for t in range(T):                       # small T: fully unrolled
            h, c = step(t, (h, c))
    else:                                        # large T: bounded live ranges
        h, c = lax.fori_loop(0, T, step, (h, c), unroll=4)

    # ---- MLP head on the final hidden state (Dropout = identity in eval).
    z = jnp.maximum(
        jnp.dot(h.astype(mdt), w1_ref[...],
                preferred_element_type=jnp.float32) + b1_ref[...], 0.0)
    z = jnp.maximum(
        jnp.dot(z.astype(mdt), w2_ref[...],
                preferred_element_type=jnp.float32) + b2_ref[...], 0.0)
    z = jnp.dot(z.astype(mdt), w3_ref[...],
                preferred_element_type=jnp.float32) + b3_ref[...]
    out_ref[...] = z


def make_lstm_classifier(params, *, matmul_dtype=jnp.float32):
    """Pads / packs the weights ONCE and returns a jitted forward(x).

    matmul_dtype=jnp.bfloat16 halves MXU work and weight traffic on v6e/v7x
    (f32 accumulation, elementwise math stays f32); keep f32 on v5e.
    """
    H = params["w_hh"].shape[1]
    I = params["w_ih"].shape[1]
    F = params["w_fc1"].shape[0]
    O = params["w_fc3"].shape[0]

    # Packed-gate layout when all four gates fit one 128-lane block
    # (4x less per-step MXU/EUP work, 4x smaller gx scratch); otherwise the
    # gate-blocked layout (each gate padded to a multiple of 128 lanes).
    S = 32 if 4 * H <= 128 else _round_up(H, 128)     # per-gate lane stride
    Gp = 4 * S
    Ip = _round_up(max(I, 128), 128)                  # lane-aligned input
    Fp = _round_up(max(F, 128), 128)                  # FC hidden (100 -> 128)
    Op = _round_up(max(O, 128), 128)                  # lane-dense output block
    f32 = jnp.float32
    mdt = matmul_dtype

    def pad2(a, shape, dtype):
        a = jnp.asarray(a, f32)
        return jnp.pad(a, [(0, s - d) for d, s in zip(a.shape, shape)]).astype(dtype)

    def gate_pack(w, rows_pad, dtype):
        # w: (rows, 4*H), PyTorch gate order (i, f, g, o) ->
        # (rows_pad, 4*S): each gate in its own S-lane block, zero padded.
        r = w.shape[0]
        w4 = jnp.asarray(w, f32).reshape(r, 4, H)
        w4 = jnp.pad(w4, ((0, rows_pad - r), (0, 0), (0, S - H)))
        return w4.reshape(rows_pad, Gp).astype(dtype)

    # LSTM weights: transpose to (in, out); fold the two biases; gate-pack.
    w_ih_p = gate_pack(params["w_ih"].T, Ip, mdt)                      # (Ip, Gp)
    w_hh_p = gate_pack(params["w_hh"].T, S, mdt)                       # (S,  Gp)
    b_p = gate_pack((params["b_ih"] + params["b_hh"])[None, :], 1, f32)  # (1, Gp)

    # FC head: transpose, zero-pad to lane-dense widths.
    w1_p = pad2(params["w_fc1"].T, (S, Fp), mdt)
    b1_p = pad2(params["b_fc1"][None, :], (1, Fp), f32)
    w2_p = pad2(params["w_fc2"].T, (Fp, Fp), mdt)
    b2_p = pad2(params["b_fc2"][None, :], (1, Fp), f32)
    w3_p = pad2(params["w_fc3"].T, (Fp, Op), mdt)
    b3_p = pad2(params["b_fc3"][None, :], (1, Op), f32)

    @jax.jit
    def forward(x):
        if x.ndim != 3 or x.shape[2] != I:
            raise ValueError(f"expected (B, T, {I}) input, got {x.shape}")
        B, T, _ = x.shape
        Bp = _round_up(max(B, 8), 8)              # sublane-aligned batch

        # x: (B, T, I) -> time-major, pad batch/features, collapse to
        # (T*Bp, Ip) so the hoisted projection is one matmul and each
        # per-step slice gx[t*Bp:(t+1)*Bp, :] is (8,128)-tile aligned.
        x_tm = jnp.transpose(x.astype(f32), (1, 0, 2))                 # (T,B,I)
        x_tm = jnp.pad(x_tm, ((0, 0), (0, Bp - B), (0, Ip - I)))       # (T,Bp,Ip)
        x_flat = x_tm.reshape(T * Bp, Ip).astype(mdt)

        # Everything is VMEM-resident with no pipelining: guard the footprint
        # against the smallest budget (v7x: 64 MiB physical / 32 MiB scoped).
        mi = jnp.dtype(mdt).itemsize
        resident = (T * Bp * Ip * mi                      # x
                    + T * Bp * Gp * 4                     # gx scratch (f32)
                    + (Ip + S) * Gp * mi                  # w_ih, w_hh
                    + (S + Fp) * Fp * mi + Fp * Op * mi   # FC weights
                    + (Gp + 2 * Fp + Op) * 4              # biases
                    + Bp * Op * 4)                        # output
        assert resident < 24 * 1024 * 1024, (
            "LSTM kernel VMEM footprint too large for full residency; "
            "chunk the time axis (see TODO at top of file).")

        kernel = functools.partial(_lstm_mlp_kernel, seq_len=T,
                                   batch_pad=Bp, gate_stride=S)
        vmem = pl.BlockSpec(memory_space=pltpu.MemorySpace.VMEM)

        out = pl.pallas_call(
            kernel,
            out_shape=jax.ShapeDtypeStruct((Bp, Op), jnp.float32),
            in_specs=[vmem] * 10,
            out_specs=vmem,
            scratch_shapes=[pltpu.VMEM((T * Bp, Gp), jnp.float32)],    # gates_x
        )(x_flat, w_ih_p, b_p, w_hh_p, w1_p, b1_p, w2_p, b2_p, w3_p, b3_p)

        return jnp.squeeze(out[:B, :O])

    return forward


def init_params(key, input_size, hidden_size, output_size):
    """Deterministic synthetic init (PyTorch-style uniform ranges)."""
    ks = jax.random.split(key, 10)
    k_lstm = 1.0 / jnp.sqrt(hidden_size)

    def u(k, shape, bound):
        return jax.random.uniform(k, shape, jnp.float32, -bound, bound)

    return {
        "w_ih": u(ks[0], (4 * hidden_size, input_size), k_lstm),
        "w_hh": u(ks[1], (4 * hidden_size, hidden_size), k_lstm),
        "b_ih": u(ks[2], (4 * hidden_size,), k_lstm),
        "b_hh": u(ks[3], (4 * hidden_size,), k_lstm),
        "w_fc1": u(ks[4], (100, hidden_size), 1.0 / jnp.sqrt(hidden_size)),
        "b_fc1": u(ks[5], (100,), 1.0 / jnp.sqrt(hidden_size)),
        "w_fc2": u(ks[6], (100, 100), 1.0 / jnp.sqrt(100.0)),
        "b_fc2": u(ks[7], (100,), 1.0 / jnp.sqrt(100.0)),
        "w_fc3": u(ks[8], (output_size, 100), 1.0 / jnp.sqrt(100.0)),
        "b_fc3": u(ks[9], (output_size,), 1.0 / jnp.sqrt(100.0)),
    }


def reference_forward(x, params):
    """Pure-JAX reference mirroring the PyTorch forward exactly."""
    B, T, I = x.shape
    H = params["w_hh"].shape[1]

    def cell(carry, x_t):
        h, c = carry
        gates = (x_t @ params["w_ih"].T + params["b_ih"]
                 + h @ params["w_hh"].T + params["b_hh"])
        i = jax.nn.sigmoid(gates[:, 0 * H:1 * H])
        f = jax.nn.sigmoid(gates[:, 1 * H:2 * H])
        g = jnp.tanh(gates[:, 2 * H:3 * H])
        o = jax.nn.sigmoid(gates[:, 3 * H:4 * H])
        c = f * c + i * g
        h = o * jnp.tanh(c)
        return (h, c), h

    init = (jnp.zeros((B, H), jnp.float32), jnp.zeros((B, H), jnp.float32))
    (_, _), hs = lax.scan(cell, init, jnp.transpose(x, (1, 0, 2)))
    hs = jnp.transpose(hs, (1, 0, 2))                     # (B, T, H)

    z = hs @ params["w_fc1"].T + params["b_fc1"]
    z = jnp.maximum(z, 0.0)
    z = z @ params["w_fc2"].T + params["b_fc2"]
    z = jnp.maximum(z, 0.0)
    z = z @ params["w_fc3"].T + params["b_fc3"]           # (B, T, O)
    return jnp.squeeze(z[:, -1])


if __name__ == "__main__":
    B, T, INPUT_SIZE, HIDDEN_SIZE, OUTPUT_SIZE = 2, 8, 16, 32, 1

    key = jax.random.PRNGKey(0)
    k_x, k_p = jax.random.split(key)
    x = jax.random.normal(k_x, (B, T, INPUT_SIZE), dtype=jnp.float32)
    params = init_params(k_p, INPUT_SIZE, HIDDEN_SIZE, OUTPUT_SIZE)

    y_ref = reference_forward(x, params)

    # Weight prep hoisted out of the per-call path (prepared once here).
    forward = make_lstm_classifier(params)                # f32 MXU operands
    y = jax.block_until_ready(forward(x))
    assert y.shape == y_ref.shape, (y.shape, y_ref.shape)
    assert jnp.allclose(y, y_ref, atol=1e-5, rtol=1e-5), (y, y_ref)

    # bf16 MXU-operand path (v6e/v7x optimization); looser tolerance vs f32 ref.
    forward_bf16 = make_lstm_classifier(params, matmul_dtype=jnp.bfloat16)
    y_bf16 = jax.block_until_ready(forward_bf16(x))
    assert y_bf16.shape == y_ref.shape, (y_bf16.shape, y_ref.shape)
    assert jnp.allclose(y_bf16, y_ref, atol=5e-2, rtol=5e-2), (y_bf16, y_ref)

    print("KERNEL_OK")
</pallas_src>

<mosaic_0001>
module attributes {stable_mosaic.version = 11 : i64} {
  func.func @_lstm_mlp_kernel(%arg0: memref<64x128xf32, #tpu.memory_space<vmem>>, %arg1: memref<128x128xf32, #tpu.memory_space<vmem>>, %arg2: memref<1x128xf32, #tpu.memory_space<vmem>>, %arg3: memref<32x128xf32, #tpu.memory_space<vmem>>, %arg4: memref<32x128xf32, #tpu.memory_space<vmem>>, %arg5: memref<1x128xf32, #tpu.memory_space<vmem>>, %arg6: memref<128x128xf32, #tpu.memory_space<vmem>>, %arg7: memref<1x128xf32, #tpu.memory_space<vmem>>, %arg8: memref<128x128xf32, #tpu.memory_space<vmem>>, %arg9: memref<1x128xf32, #tpu.memory_space<vmem>>, %arg10: memref<8x128xf32, #tpu.memory_space<vmem>>, %arg11: memref<64x128xf32, #tpu.memory_space<vmem>>) attributes {dimension_semantics = [], scalar_prefetch = 0 : i64, scratch_operands = 1 : i64, tpu.core_type = #tpu.core_type<tc>} {
    %c0 = arith.constant 0 : index
    %c0_0 = arith.constant 0 : index
    %0 = vector.load %arg0[%c0, %c0_0] : memref<64x128xf32, #tpu.memory_space<vmem>>, vector<64x128xf32>
    %c0_1 = arith.constant 0 : index
    %c0_2 = arith.constant 0 : index
    %1 = vector.load %arg1[%c0_1, %c0_2] : memref<128x128xf32, #tpu.memory_space<vmem>>, vector<128x128xf32>
    %cst = arith.constant dense<0.000000e+00> : vector<64x128xf32>
    %2 = tpu.matmul %0, %1, %cst {dimension_numbers = #tpu.dot_dimension_numbers<[1], [0], [0], [1], [0, 0, 1, 1], [], []>} : vector<64x128xf32>, vector<128x128xf32>, vector<64x128xf32> -> vector<64x128xf32>
    %c0_3 = arith.constant 0 : index
    %c0_4 = arith.constant 0 : index
    %3 = vector.load %arg2[%c0_3, %c0_4] : memref<1x128xf32, #tpu.memory_space<vmem>>, vector<1x128xf32>
    %4 = vector.broadcast %3 : vector<1x128xf32> to vector<64x128xf32>
    %5 = arith.addf %2, %4 : vector<64x128xf32>
    %c0_5 = arith.constant 0 : index
    %c0_6 = arith.constant 0 : index
    %6 = vector.load %arg11[%c0_5, %c0_6] : memref<64x128xf32, #tpu.memory_space<vmem>>, vector<64x128xf32>
    tpu.vector_store %arg11[%c0_5, %c0_6], %5 {strides = array<i32>} : memref<64x128xf32, #tpu.memory_space<vmem>>, vector<64x128xf32>,
    %c0_7 = arith.constant 0 : index
    %c0_8 = arith.constant 0 : index
    %7 = vector.load %arg3[%c0_7, %c0_8] : memref<32x128xf32, #tpu.memory_space<vmem>>, vector<32x128xf32>
    %8 = tpu.iota {dimensions = array<i32: 1>} : vector<8x128xi32>
    %c64_i32 = arith.constant 64 : i32
    %9 = vector.broadcast %c64_i32 : i32 to vector<8x128xi32>
    %10 = arith.cmpi sge, %8, %9 : vector<8x128xi32>
    %c96_i32 = arith.constant 96 : i32
    %11 = vector.broadcast %c96_i32 : i32 to vector<8x128xi32>
    %12 = arith.cmpi slt, %8, %11 : vector<8x128xi32>
    %13 = arith.andi %10, %12 : vector<8x128xi1>
    %cst_9 = arith.constant 1.000000e+00 : f32
    %cst_10 = arith.constant 5.000000e-01 : f32
    %14 = vector.broadcast %cst_9 : f32 to vector<8x128xf32>
    %15 = vector.broadcast %cst_10 : f32 to vector<8x128xf32>
    %16 = arith.select %13, %14, %15 : vector<8x128xi1>, vector<8x128xf32>
    %cst_11 = arith.constant 0.000000e+00 : f32
    %cst_12 = arith.constant 5.000000e-01 : f32
    %17 = vector.broadcast %cst_11 : f32 to vector<8x128xf32>
    %18 = vector.broadcast %cst_12 : f32 to vector<8x128xf32>
    %19 = arith.select %13, %17, %18 : vector<8x128xi1>, vector<8x128xf32>
    %cst_13 = arith.constant 0.000000e+00 : f32
    %20 = vector.broadcast %cst_13 : f32 to vector<8x32xf32>
    %cst_14 = arith.constant 0.000000e+00 : f32
    %21 = vector.broadcast %cst_14 : f32 to vector<8x32xf32>
    %c0_15 = arith.constant 0 : index
    %c0_16 = arith.constant 0 : index
    %22 = vector.load %arg11[%c0_15, %c0_16] : memref<64x128xf32, #tpu.memory_space<vmem>>, vector<8x128xf32>
    %cst_17 = arith.constant dense<0.000000e+00> : vector<8x128xf32>
    %23 = tpu.matmul %20, %7, %cst_17 {dimension_numbers = #tpu.dot_dimension_numbers<[1], [0], [0], [1], [0, 0, 1, 1], [], []>} : vector<8x32xf32>, vector<32x128xf32>, vector<8x128xf32> -> vector<8x128xf32>
    %24 = arith.addf %22, %23 : vector<8x128xf32>
    %25 = arith.mulf %16, %24 : vector<8x128xf32>
    %26 = math.tanh %25 : vector<8x128xf32>
    %27 = arith.mulf %16, %26 : vector<8x128xf32>
    %28 = arith.addf %27, %19 : vector<8x128xf32>
    %29 = vector.extract_strided_slice %28 {offsets = [0, 0], sizes = [8, 32], strides = [1, 1]} : vector<8x128xf32> to vector<8x32xf32>
    %30 = vector.extract_strided_slice %28 {offsets = [0, 32], sizes = [8, 32], strides = [1, 1]} : vector<8x128xf32> to vector<8x32xf32>
    %31 = vector.extract_strided_slice %28 {offsets = [0, 64], sizes = [8, 32], strides = [1, 1]} : vector<8x128xf32> to vector<8x32xf32>
    %32 = vector.extract_strided_slice %28 {offsets = [0, 96], sizes = [8, 32], strides = [1, 1]} : vector<8x128xf32> to vector<8x32xf32>
    %33 = arith.mulf %30, %21 : vector<8x32xf32>
    %34 = arith.mulf %29, %31 : vector<8x32xf32>
    %35 = arith.addf %33, %34 : vector<8x32xf32>
    %36 = math.tanh %35 : vector<8x32xf32>
    %37 = arith.mulf %32, %36 : vector<8x32xf32>
    %c8 = arith.constant 8 : index
    %c0_18 = arith.constant 0 : index
    %38 = vector.load %arg11[%c8, %c0_18] : memref<64x128xf32, #tpu.memory_space<vmem>>, vector<8x128xf32>
    %cst_19 = arith.constant dense<0.000000e+00> : vector<8x128xf32>
    %39 = tpu.matmul %37, %7, %cst_19 {dimension_numbers = #tpu.dot_dimension_numbers<[1], [0], [0], [1], [0, 0, 1, 1], [], []>} : vector<8x32xf32>, vector<32x128xf32>, vector<8x128xf32> -> vector<8x128xf32>
    %40 = arith.addf %38, %39 : vector<8x128xf32>
    %41 = arith.mulf %16, %40 : vector<8x128xf32>
    %42 = math.tanh %41 : vector<8x128xf32>
    %43 = arith.mulf %16, %42 : vector<8x128xf32>
    %44 = arith.addf %43, %19 : vector<8x128xf32>
    %45 = vector.extract_strided_slice %44 {offsets = [0, 0], sizes = [8, 32], strides = [1, 1]} : vector<8x128xf32> to vector<8x32xf32>
    %46 = vector.extract_strided_slice %44 {offsets = [0, 32], sizes = [8, 32], strides = [1, 1]} : vector<8x128xf32> to vector<8x32xf32>
    %47 = vector.extract_strided_slice %44 {offsets = [0, 64], sizes = [8, 32], strides = [1, 1]} : vector<8x128xf32> to vector<8x32xf32>
    %48 = vector.extract_strided_slice %44 {offsets = [0, 96], sizes = [8, 32], strides = [1, 1]} : vector<8x128xf32> to vector<8x32xf32>
    %49 = arith.mulf %46, %35 : vector<8x32xf32>
    %50 = arith.mulf %45, %47 : vector<8x32xf32>
    %51 = arith.addf %49, %50 : vector<8x32xf32>
    %52 = math.tanh %51 : vector<8x32xf32>
    %53 = arith.mulf %48, %52 : vector<8x32xf32>
    %c16 = arith.constant 16 : index
    %c0_20 = arith.constant 0 : index
    %54 = vector.load %arg11[%c16, %c0_20] : memref<64x128xf32, #tpu.memory_space<vmem>>, vector<8x128xf32>
    %cst_21 = arith.constant dense<0.000000e+00> : vector<8x128xf32>
    %55 = tpu.matmul %53, %7, %cst_21 {dimension_numbers = #tpu.dot_dimension_numbers<[1], [0], [0], [1], [0, 0, 1, 1], [], []>} : vector<8x32xf32>, vector<32x128xf32>, vector<8x128xf32> -> vector<8x128xf32>
    %56 = arith.addf %54, %55 : vector<8x128xf32>
    %57 = arith.mulf %16, %56 : vector<8x128xf32>
    %58 = math.tanh %57 : vector<8x128xf32>
    %59 = arith.mulf %16, %58 : vector<8x128xf32>
    %60 = arith.addf %59, %19 : vector<8x128xf32>
    %61 = vector.extract_strided_slice %60 {offsets = [0, 0], sizes = [8, 32], strides = [1, 1]} : vector<8x128xf32> to vector<8x32xf32>
    %62 = vector.extract_strided_slice %60 {offsets = [0, 32], sizes = [8, 32], strides = [1, 1]} : vector<8x128xf32> to vector<8x32xf32>
    %63 = vector.extract_strided_slice %60 {offsets = [0, 64], sizes = [8, 32], strides = [1, 1]} : vector<8x128xf32> to vector<8x32xf32>
    %64 = vector.extract_strided_slice %60 {offsets = [0, 96], sizes = [8, 32], strides = [1, 1]} : vector<8x128xf32> to vector<8x32xf32>
    %65 = arith.mulf %62, %51 : vector<8x32xf32>
    %66 = arith.mulf %61, %63 : vector<8x32xf32>
    %67 = arith.addf %65, %66 : vector<8x32xf32>
    %68 = math.tanh %67 : vector<8x32xf32>
    %69 = arith.mulf %64, %68 : vector<8x32xf32>
    %c24 = arith.constant 24 : index
    %c0_22 = arith.constant 0 : index
    %70 = vector.load %arg11[%c24, %c0_22] : memref<64x128xf32, #tpu.memory_space<vmem>>, vector<8x128xf32>
    %cst_23 = arith.constant dense<0.000000e+00> : vector<8x128xf32>
    %71 = tpu.matmul %69, %7, %cst_23 {dimension_numbers = #tpu.dot_dimension_numbers<[1], [0], [0], [1], [0, 0, 1, 1], [], []>} : vector<8x32xf32>, vector<32x128xf32>, vector<8x128xf32> -> vector<8x128xf32>
    %72 = arith.addf %70, %71 : vector<8x128xf32>
    %73 = arith.mulf %16, %72 : vector<8x128xf32>
    %74 = math.tanh %73 : vector<8x128xf32>
    %75 = arith.mulf %16, %74 : vector<8x128xf32>
    %76 = arith.addf %75, %19 : vector<8x128xf32>
    %77 = vector.extract_strided_slice %76 {offsets = [0, 0], sizes = [8, 32], strides = [1, 1]} : vector<8x128xf32> to vector<8x32xf32>
    %78 = vector.extract_strided_slice %76 {offsets = [0, 32], sizes = [8, 32], strides = [1, 1]} : vector<8x128xf32> to vector<8x32xf32>
    %79 = vector.extract_strided_slice %76 {offsets = [0, 64], sizes = [8, 32], strides = [1, 1]} : vector<8x128xf32> to vector<8x32xf32>
    %80 = vector.extract_strided_slice %76 {offsets = [0, 96], sizes = [8, 32], strides = [1, 1]} : vector<8x128xf32> to vector<8x32xf32>
    %81 = arith.mulf %78, %67 : vector<8x32xf32>
    %82 = arith.mulf %77, %79 : vector<8x32xf32>
    %83 = arith.addf %81, %82 : vector<8x32xf32>
    %84 = math.tanh %83 : vector<8x32xf32>
    %85 = arith.mulf %80, %84 : vector<8x32xf32>
    %c32 = arith.constant 32 : index
    %c0_24 = arith.constant 0 : index
    %86 = vector.load %arg11[%c32, %c0_24] : memref<64x128xf32, #tpu.memory_space<vmem>>, vector<8x128xf32>
    %cst_25 = arith.constant dense<0.000000e+00> : vector<8x128xf32>
    %87 = tpu.matmul %85, %7, %cst_25 {dimension_numbers = #tpu.dot_dimension_numbers<[1], [0], [0], [1], [0, 0, 1, 1], [], []>} : vector<8x32xf32>, vector<32x128xf32>, vector<8x128xf32> -> vector<8x128xf32>
    %88 = arith.addf %86, %87 : vector<8x128xf32>
    %89 = arith.mulf %16, %88 : vector<8x128xf32>
    %90 = math.tanh %89 : vector<8x128xf32>
    %91 = arith.mulf %16, %90 : vector<8x128xf32>
    %92 = arith.addf %91, %19 : vector<8x128xf32>
    %93 = vector.extract_strided_slice %92 {offsets = [0, 0], sizes = [8, 32], strides = [1, 1]} : vector<8x128xf32> to vector<8x32xf32>
    %94 = vector.extract_strided_slice %92 {offsets = [0, 32], sizes = [8, 32], strides = [1, 1]} : vector<8x128xf32> to vector<8x32xf32>
    %95 = vector.extract_strided_slice %92 {offsets = [0, 64], sizes = [8, 32], strides = [1, 1]} : vector<8x128xf32> to vector<8x32xf32>
    %96 = vector.extract_strided_slice %92 {offsets = [0, 96], sizes = [8, 32], strides = [1, 1]} : vector<8x128xf32> to vector<8x32xf32>
    %97 = arith.mulf %94, %83 : vector<8x32xf32>
    %98 = arith.mulf %93, %95 : vector<8x32xf32>
    %99 = arith.addf %97, %98 : vector<8x32xf32>
    %100 = math.tanh %99 : vector<8x32xf32>
    %101 = arith.mulf %96, %100 : vector<8x32xf32>
    %c40 = arith.constant 40 : index
    %c0_26 = arith.constant 0 : index
    %102 = vector.load %arg11[%c40, %c0_26] : memref<64x128xf32, #tpu.memory_space<vmem>>, vector<8x128xf32>
    %cst_27 = arith.constant dense<0.000000e+00> : vector<8x128xf32>
    %103 = tpu.matmul %101, %7, %cst_27 {dimension_numbers = #tpu.dot_dimension_numbers<[1], [0], [0], [1], [0, 0, 1, 1], [], []>} : vector<8x32xf32>, vector<32x128xf32>, vector<8x128xf32> -> vector<8x128xf32>
    %104 = arith.addf %102, %103 : vector<8x128xf32>
    %105 = arith.mulf %16, %104 : vector<8x128xf32>
    %106 = math.tanh %105 : vector<8x128xf32>
    %107 = arith.mulf %16, %106 : vector<8x128xf32>
    %108 = arith.addf %107, %19 : vector<8x128xf32>
    %109 = vector.extract_strided_slice %108 {offsets = [0, 0], sizes = [8, 32], strides = [1, 1]} : vector<8x128xf32> to vector<8x32xf32>
    %110 = vector.extract_strided_slice %108 {offsets = [0, 32], sizes = [8, 32], strides = [1, 1]} : vector<8x128xf32> to vector<8x32xf32>
    %111 = vector.extract_strided_slice %108 {offsets = [0, 64], sizes = [8, 32], strides = [1, 1]} : vector<8x128xf32> to vector<8x32xf32>
    %112 = vector.extract_strided_slice %108 {offsets = [0, 96], sizes = [8, 32], strides = [1, 1]} : vector<8x128xf32> to vector<8x32xf32>
    %113 = arith.mulf %110, %99 : vector<8x32xf32>
    %114 = arith.mulf %109, %111 : vector<8x32xf32>
    %115 = arith.addf %113, %114 : vector<8x32xf32>
    %116 = math.tanh %115 : vector<8x32xf32>
    %117 = arith.mulf %112, %116 : vector<8x32xf32>
    %c48 = arith.constant 48 : index
    %c0_28 = arith.constant 0 : index
    %118 = vector.load %arg11[%c48, %c0_28] : memref<64x128xf32, #tpu.memory_space<vmem>>, vector<8x128xf32>
    %cst_29 = arith.constant dense<0.000000e+00> : vector<8x128xf32>
    %119 = tpu.matmul %117, %7, %cst_29 {dimension_numbers = #tpu.dot_dimension_numbers<[1], [0], [0], [1], [0, 0, 1, 1], [], []>} : vector<8x32xf32>, vector<32x128xf32>, vector<8x128xf32> -> vector<8x128xf32>
    %120 = arith.addf %118, %119 : vector<8x128xf32>
    %121 = arith.mulf %16, %120 : vector<8x128xf32>
    %122 = math.tanh %121 : vector<8x128xf32>
    %123 = arith.mulf %16, %122 : vector<8x128xf32>
    %124 = arith.addf %123, %19 : vector<8x128xf32>
    %125 = vector.extract_strided_slice %124 {offsets = [0, 0], sizes = [8, 32], strides = [1, 1]} : vector<8x128xf32> to vector<8x32xf32>
    %126 = vector.extract_strided_slice %124 {offsets = [0, 32], sizes = [8, 32], strides = [1, 1]} : vector<8x128xf32> to vector<8x32xf32>
    %127 = vector.extract_strided_slice %124 {offsets = [0, 64], sizes = [8, 32], strides = [1, 1]} : vector<8x128xf32> to vector<8x32xf32>
    %128 = vector.extract_strided_slice %124 {offsets = [0, 96], sizes = [8, 32], strides = [1, 1]} : vector<8x128xf32> to vector<8x32xf32>
    %129 = arith.mulf %126, %115 : vector<8x32xf32>
    %130 = arith.mulf %125, %127 : vector<8x32xf32>
    %131 = arith.addf %129, %130 : vector<8x32xf32>
    %132 = math.tanh %131 : vector<8x32xf32>
    %133 = arith.mulf %128, %132 : vector<8x32xf32>
    %c56 = arith.constant 56 : index
    %c0_30 = arith.constant 0 : index
    %134 = vector.load %arg11[%c56, %c0_30] : memref<64x128xf32, #tpu.memory_space<vmem>>, vector<8x128xf32>
    %cst_31 = arith.constant dense<0.000000e+00> : vector<8x128xf32>
    %135 = tpu.matmul %133, %7, %cst_31 {dimension_numbers = #tpu.dot_dimension_numbers<[1], [0], [0], [1], [0, 0, 1, 1], [], []>} : vector<8x32xf32>, vector<32x128xf32>, vector<8x128xf32> -> vector<8x128xf32>
    %136 = arith.addf %134, %135 : vector<8x128xf32>
    %137 = arith.mulf %16, %136 : vector<8x128xf32>
    %138 = math.tanh %137 : vector<8x128xf32>
    %139 = arith.mulf %16, %138 : vector<8x128xf32>
    %140 = arith.addf %139, %19 : vector<8x128xf32>
    %141 = vector.extract_strided_slice %140 {offsets = [0, 0], sizes = [8, 32], strides = [1, 1]} : vector<8x128xf32> to vector<8x32xf32>
    %142 = vector.extract_strided_slice %140 {offsets = [0, 32], sizes = [8, 32], strides = [1, 1]} : vector<8x128xf32> to vector<8x32xf32>
    %143 = vector.extract_strided_slice %140 {offsets = [0, 64], sizes = [8, 32], strides = [1, 1]} : vector<8x128xf32> to vector<8x32xf32>
    %144 = vector.extract_strided_slice %140 {offsets = [0, 96], sizes = [8, 32], strides = [1, 1]} : vector<8x128xf32> to vector<8x32xf32>
    %145 = arith.mulf %142, %131 : vector<8x32xf32>
    %146 = arith.mulf %141, %143 : vector<8x32xf32>
    %147 = arith.addf %145, %146 : vector<8x32xf32>
    %148 = math.tanh %147 : vector<8x32xf32>
    %149 = arith.mulf %144, %148 : vector<8x32xf32>
    %c0_32 = arith.constant 0 : index
    %c0_33 = arith.constant 0 : index
    %150 = vector.load %arg4[%c0_32, %c0_33] : memref<32x128xf32, #tpu.memory_space<vmem>>, vector<32x128xf32>
    %cst_34 = arith.constant dense<0.000000e+00> : vector<8x128xf32>
    %151 = tpu.matmul %149, %150, %cst_34 {dimension_numbers = #tpu.dot_dimension_numbers<[1], [0], [0], [1], [0, 0, 1, 1], [], []>} : vector<8x32xf32>, vector<32x128xf32>, vector<8x128xf32> -> vector<8x128xf32>
    %c0_35 = arith.constant 0 : index
    %c0_36 = arith.constant 0 : index
    %152 = vector.load %arg5[%c0_35, %c0_36] : memref<1x128xf32, #tpu.memory_space<vmem>>, vector<1x128xf32>
    %153 = vector.broadcast %152 : vector<1x128xf32> to vector<8x128xf32>
    %154 = arith.addf %151, %153 : vector<8x128xf32>
    %cst_37 = arith.constant 0.000000e+00 : f32
    %155 = vector.broadcast %cst_37 : f32 to vector<8x128xf32>
    %156 = arith.maximumf %154, %155 : vector<8x128xf32>
    %c0_38 = arith.constant 0 : index
    %c0_39 = arith.constant 0 : index
    %157 = vector.load %arg6[%c0_38, %c0_39] : memref<128x128xf32, #tpu.memory_space<vmem>>, vector<128x128xf32>
    %cst_40 = arith.constant dense<0.000000e+00> : vector<8x128xf32>
    %158 = tpu.matmul %156, %157, %cst_40 {dimension_numbers = #tpu.dot_dimension_numbers<[1], [0], [0], [1], [0, 0, 1, 1], [], []>} : vector<8x128xf32>, vector<128x128xf32>, vector<8x128xf32> -> vector<8x128xf32>
    %c0_41 = arith.constant 0 : index
    %c0_42 = arith.constant 0 : index
    %159 = vector.load %arg7[%c0_41, %c0_42] : memref<1x128xf32, #tpu.memory_space<vmem>>, vector<1x128xf32>
    %160 = vector.broadcast %159 : vector<1x128xf32> to vector<8x128xf32>
    %161 = arith.addf %158, %160 : vector<8x128xf32>
    %cst_43 = arith.constant 0.000000e+00 : f32
    %162 = vector.broadcast %cst_43 : f32 to vector<8x128xf32>
    %163 = arith.maximumf %161, %162 : vector<8x128xf32>
    %c0_44 = arith.constant 0 : index
    %c0_45 = arith.constant 0 : index
    %164 = vector.load %arg8[%c0_44, %c0_45] : memref<128x128xf32, #tpu.memory_space<vmem>>, vector<128x128xf32>
    %cst_46 = arith.constant dense<0.000000e+00> : vector<8x128xf32>
    %165 = tpu.matmul %163, %164, %cst_46 {dimension_numbers = #tpu.dot_dimension_numbers<[1], [0], [0], [1], [0, 0, 1, 1], [], []>} : vector<8x128xf32>, vector<128x128xf32>, vector<8x128xf32> -> vector<8x128xf32>
    %c0_47 = arith.constant 0 : index
    %c0_48 = arith.constant 0 : index
    %166 = vector.load %arg9[%c0_47, %c0_48] : memref<1x128xf32, #tpu.memory_space<vmem>>, vector<1x128xf32>
    %167 = vector.broadcast %166 : vector<1x128xf32> to vector<8x128xf32>
    %168 = arith.addf %165, %167 : vector<8x128xf32>
    %c0_49 = arith.constant 0 : index
    %c0_50 = arith.constant 0 : index
    %169 = vector.load %arg10[%c0_49, %c0_50] : memref<8x128xf32, #tpu.memory_space<vmem>>, vector<8x128xf32>
    tpu.vector_store %arg10[%c0_49, %c0_50], %168 {strides = array<i32>} : memref<8x128xf32, #tpu.memory_space<vmem>>, vector<8x128xf32>,
    return
  }
}

</mosaic_0001>

<llo_original>
// kernel: forward.1
$region0: #{forward.1}
  #allocation0 [shape = 'u32[]', space=smem, size = 0x4, offset = 0x4, fixed_abs, tag = 'smem constant byte address 0x4 - core index']
  #allocation1 [shape = 'u32[144,128]{1,0:T(1,128)}', space=vmem, size = 0x12000, scoped, tag = 'internal scratch']
  #allocation2 [shape = 'f32[64,128]{1,0:T(8,128)}', space=vmem, size = 0x8000, scoped, tag = 'scratch operand']
  %s0 = inlined_call_operand.vmem [shape: f32[64,128], index: 0, kind: input, shape index: {}]
  %s1 = inlined_call_operand.hbm [shape: f32[128,128], index: 1, kind: input, shape index: {}]
  %s2 = inlined_call_operand.hbm [shape: f32[1,128], index: 2, kind: input, shape index: {}]
  %s3 = inlined_call_operand.hbm [shape: f32[32,128], index: 3, kind: input, shape index: {}]
  %s4 = inlined_call_operand.hbm [shape: f32[32,128], index: 4, kind: input, shape index: {}]
  %s5 = inlined_call_operand.hbm [shape: f32[1,128], index: 5, kind: input, shape index: {}]
  %s6 = inlined_call_operand.hbm [shape: f32[128,128], index: 6, kind: input, shape index: {}]
  %s7 = inlined_call_operand.hbm [shape: f32[1,128], index: 7, kind: input, shape index: {}]
  %s8 = inlined_call_operand.vmem [shape: f32[128,128], index: 8, kind: input, shape index: {}]
  %s9 = inlined_call_operand.vmem [shape: f32[1,128], index: 9, kind: input, shape index: {}]
  %s10 = inlined_call_operand.vmem [shape: f32[8,128], index: 10, kind: output, shape index: {}]
  %s11 = sld [smem:[#allocation0]]
  $region78: #{forward.1} parent=0
    _
  %s13 = ssub.s32 1, %s11
  %s14 = scalar_select 0, %s13, %s11
  $region1: #{forward.1} parent=0
    #allocation3 [shape = 'u8[65536]{0}', space=vmem, size = 0x10000, scoped, tag = 'input window, operand 1, single buffered']
    #allocation4 [shape = 's32[1]{0}', space=sflag, size = 0x4, scoped, tag = 'scoped memory for forward.1']
    #allocation5 [shape = 'u8[512]{0}', space=vmem, size = 0x400, scoped, tag = 'input window, operand 2, single buffered']
    #allocation6 [shape = 's32[1]{0}', space=sflag, size = 0x4, scoped, tag = 'scoped memory for forward.1']
    #allocation7 [shape = 'u8[16384]{0}', space=vmem, size = 0x4000, scoped, tag = 'input window, operand 3, single buffered']
    #allocation8 [shape = 'u8[16384]{0}', space=vmem, size = 0x4000, scoped, tag = 'input window, operand 4, single buffered']
    #allocation9 [shape = 's32[1]{0}', space=sflag, size = 0x4, scoped, tag = 'scoped memory for forward.1']
    #allocation10 [shape = 'u8[512]{0}', space=vmem, size = 0x400, scoped, tag = 'input window, operand 5, single buffered']
    #allocation11 [shape = 'u8[65536]{0}', space=vmem, size = 0x10000, scoped, tag = 'input window, operand 6, single buffered']
    #allocation12 [shape = 's32[1]{0}', space=sflag, size = 0x4, scoped, tag = 'scoped memory for forward.1']
    #allocation13 [shape = 'u8[512]{0}', space=vmem, size = 0x400, scoped, tag = 'input window, operand 7, single buffered']
    %15 = vsyncpa [#allocation4], 0
    %16 = vsyncpa [#allocation6], 0
    %17 = vsyncpa [#allocation9], 0
    %18 = vsyncpa [#allocation12], 0
    // Predicated region
    $region2: #{forward.1} parent=1 // pred_check
      _
    $region3: #{forward.1} parent=1 // pred_check_branch
      %20 = sbr.rel (0) target = $region5
    $region4: #{forward.1} parent=1 // pred_region
      _
    $region5: #{forward.1} parent=1 // pred_fallthru
      _
    // Predicated region
    $region6: #{forward.1} parent=1 // pred_check
      _
    $region7: #{forward.1} parent=1 // pred_check_branch
      %22 = sbr.rel (0) target = $region9
    $region8: #{forward.1} parent=1 // pred_region
      %s24 = ssub.s32 2048, 2048
      %25 = vsyncadd [#allocation4], %s24
      %s26 = sshll.u32 [#allocation3], 4
      %s27 = int_to_ptr.vmem [resolvable:$true] %s26
      %32 = dma.hbm_to_vmem [thread:$0]  %s1, 2048, %s27, [#allocation4], 128, 128, 8
    $region9: #{forward.1} parent=1 // pred_fallthru
      _
    // Predicated region
    $region10: #{forward.1} parent=1 // pred_check
      _
    $region11: #{forward.1} parent=1 // pred_check_branch
      %34 = sbr.rel (0) target = $region13
    $region12: #{forward.1} parent=1 // pred_region
      %s36 = ssub.s32 16, 16
      %37 = vsyncadd [#allocation6], %s36
      %s39 = sshll.u32 [#allocation5], 4
      %s40 = int_to_ptr.vmem [resolvable:$true] %s39
      %42 = dma.hbm_to_vmem [thread:$0]  %s2, 16, %s40, [#allocation6]
    $region13: #{forward.1} parent=1 // pred_fallthru
      _
    // Predicated region
    $region14: #{forward.1} parent=1 // pred_check
      _
    $region15: #{forward.1} parent=1 // pred_check_branch
      %44 = sbr.rel (0) target = $region17
    $region16: #{forward.1} parent=1 // pred_region
      %s46 = ssub.s32 512, 512
      %47 = vsyncadd [#allocation6], %s46
      %s48 = sshll.u32 [#allocation7], 4
      %s49 = int_to_ptr.vmem [resolvable:$true] %s48
      %54 = dma.hbm_to_vmem [thread:$0]  %s3, 512, %s49, [#allocation6], 128, 128, 8
    $region17: #{forward.1} parent=1 // pred_fallthru
      _
    // Predicated region
    $region18: #{forward.1} parent=1 // pred_check
      _
    $region19: #{forward.1} parent=1 // pred_check_branch
      %56 = sbr.rel (0) target = $region21
    $region20: #{forward.1} parent=1 // pred_region
      %s58 = ssub.s32 512, 512
      %59 = vsyncadd [#allocation9], %s58
      %s60 = sshll.u32 [#allocation8], 4
      %s61 = int_to_ptr.vmem [resolvable:$true] %s60
      %66 = dma.hbm_to_vmem [thread:$0]  %s4, 512, %s61, [#allocation9], 128, 128, 8
    $region21: #{forward.1} parent=1 // pred_fallthru
      _
    // Predicated region
    $region22: #{forward.1} parent=1 // pred_check
      _
    $region23: #{forward.1} parent=1 // pred_check_branch
      %68 = sbr.rel (0) target = $region25
    $region24: #{forward.1} parent=1 // pred_region
      %s70 = ssub.s32 16, 16
      %71 = vsyncadd [#allocation9], %s70
      %s73 = sshll.u32 [#allocation10], 4
      %s74 = int_to_ptr.vmem [resolvable:$true] %s73
      %76 = dma.hbm_to_vmem [thread:$0]  %s5, 16, %s74, [#allocation9]
    $region25: #{forward.1} parent=1 // pred_fallthru
      _
    // Predicated region
    $region26: #{forward.1} parent=1 // pred_check
      _
    $region27: #{forward.1} parent=1 // pred_check_branch
      %78 = sbr.rel (0) target = $region29
    $region28: #{forward.1} parent=1 // pred_region
      %s80 = ssub.s32 2048, 2048
      %81 = vsyncadd [#allocation12], %s80
      %s82 = sshll.u32 [#allocation11], 4
      %s83 = int_to_ptr.vmem [resolvable:$true] %s82
      %88 = dma.hbm_to_vmem [thread:$0]  %s6, 2048, %s83, [#allocation12], 128, 128, 8
    $region29: #{forward.1} parent=1 // pred_fallthru
      _
    // Predicated region
    $region30: #{forward.1} parent=1 // pred_check
      _
    $region31: #{forward.1} parent=1 // pred_check_branch
      %90 = sbr.rel (0) target = $region33
    $region32: #{forward.1} parent=1 // pred_region
      %s92 = ssub.s32 16, 16
      %93 = vsyncadd [#allocation12], %s92
      %s95 = sshll.u32 [#allocation13], 4
      %s96 = int_to_ptr.vmem [resolvable:$true] %s95
      %98 = dma.hbm_to_vmem [thread:$0]  %s7, 16, %s96, [#allocation12]
    $region33: #{forward.1} parent=1 // pred_fallthru
      _
    // Predicated region
    $region34: #{forward.1} parent=1 // pred_check
      _
    $region35: #{forward.1} parent=1 // pred_check_branch
      %100 = sbr.rel (0) target = $region37
    $region36: #{forward.1} parent=1 // pred_region
      _
    $region37: #{forward.1} parent=1 // pred_fallthru
      _
    // Predicated region
    $region38: #{forward.1} parent=1 // pred_check
      _
    $region39: #{forward.1} parent=1 // pred_check_branch
      %102 = sbr.rel (0) target = $region41
    $region40: #{forward.1} parent=1 // pred_region
      _
    $region41: #{forward.1} parent=1 // pred_fallthru
      _
    // Predicated region
    $region42: #{forward.1} parent=1 // pred_check
      _
    $region43: #{forward.1} parent=1 // pred_check_branch
      %104 = sbr.rel (0) target = $region45
    $region44: #{forward.1} parent=1 // pred_region
      %105 = dma.done [#allocation4], 2048
    $region45: #{forward.1} parent=1 // pred_fallthru
      _
    // Predicated region
    $region46: #{forward.1} parent=1 // pred_check
      _
    $region47: #{forward.1} parent=1 // pred_check_branch
      %107 = sbr.rel (0) target = $region49
    $region48: #{forward.1} parent=1 // pred_region
      %108 = dma.done [#allocation6], 16
    $region49: #{forward.1} parent=1 // pred_fallthru
      _
    // Predicated region
    $region50: #{forward.1} parent=1 // pred_check
      _
    $region51: #{forward.1} parent=1 // pred_check_branch
      %110 = sbr.rel (0) target = $region53
    $region52: #{forward.1} parent=1 // pred_region
      %111 = dma.done [#allocation6], 512
    $region53: #{forward.1} parent=1 // pred_fallthru
      _
    // Predicated region
    $region54: #{forward.1} parent=1 // pred_check
      _
    $region55: #{forward.1} parent=1 // pred_check_branch
      %113 = sbr.rel (0) target = $region57
    $region56: #{forward.1} parent=1 // pred_region
      %114 = dma.done [#allocation9], 512
    $region57: #{forward.1} parent=1 // pred_fallthru
      _
    // Predicated region
    $region58: #{forward.1} parent=1 // pred_check
      _
    $region59: #{forward.1} parent=1 // pred_check_branch
      %116 = sbr.rel (0) target = $region61
    $region60: #{forward.1} parent=1 // pred_region
      %117 = dma.done [#allocation9], 16
    $region61: #{forward.1} parent=1 // pred_fallthru
      _
    // Predicated region
    $region62: #{forward.1} parent=1 // pred_check
      _
    $region63: #{forward.1} parent=1 // pred_check_branch
      %119 = sbr.rel (0) target = $region65
    $region64: #{forward.1} parent=1 // pred_region
      %120 = dma.done [#allocation12], 2048
    $region65: #{forward.1} parent=1 // pred_fallthru
      _
    // Predicated region
    $region66: #{forward.1} parent=1 // pred_check
      _
    $region67: #{forward.1} parent=1 // pred_check_branch
      %122 = sbr.rel (0) target = $region69
    $region68: #{forward.1} parent=1 // pred_region
      %123 = dma.done [#allocation12], 16
    $region69: #{forward.1} parent=1 // pred_fallthru
      _
    %v124 = vld [vmem:[%s0] sm:$0xff]
    %v125 = vld [vmem:[%s0 + $0x8] sm:$0xff]
    %v126 = vld [vmem:[%s0 + $0x10] sm:$0xff]
    %v127 = vld [vmem:[%s0 + $0x18] sm:$0xff]
    %v128 = vld [vmem:[%s0 + $0x20] sm:$0xff]
    %v129 = vld [vmem:[%s0 + $0x28] sm:$0xff]
    %v130 = vld [vmem:[%s0 + $0x30] sm:$0xff]
    %v131 = vld [vmem:[%s0 + $0x38] sm:$0xff]
    %v132 = vld [vmem:[#allocation3] sm:$0xff]
    %v133 = vld [vmem:[#allocation3 + $0x8] sm:$0xff]
    %v134 = vld [vmem:[#allocation3 + $0x10] sm:$0xff]
    %v135 = vld [vmem:[#allocation3 + $0x18] sm:$0xff]
    %v136 = vld [vmem:[#allocation3 + $0x20] sm:$0xff]
    %v137 = vld [vmem:[#allocation3 + $0x28] sm:$0xff]
    %v138 = vld [vmem:[#allocation3 + $0x30] sm:$0xff]
    %v139 = vld [vmem:[#allocation3 + $0x38] sm:$0xff]
    %v140 = vld [vmem:[#allocation3 + $0x40] sm:$0xff]
    %v141 = vld [vmem:[#allocation3 + $0x48] sm:$0xff]
    %v142 = vld [vmem:[#allocation3 + $0x50] sm:$0xff]
    %v143 = vld [vmem:[#allocation3 + $0x58] sm:$0xff]
    %v144 = vld [vmem:[#allocation3 + $0x60] sm:$0xff]
    %v145 = vld [vmem:[#allocation3 + $0x68] sm:$0xff]
    %v146 = vld [vmem:[#allocation3 + $0x70] sm:$0xff]
    %v147 = vld [vmem:[#allocation3 + $0x78] sm:$0xff]
    %v148 = vld [vmem:[#allocation5] sm:$0x1]
    %v150 = vlaneseq
    %v151 = vshrl.u32 %v150, 7
    %v152 = vsub.s32 0, %v151
    %v153 = vrot.slane %v148, %v152
    %155 = vmatprep.subr.mxu0 0.0
    %156 = vmatpush1.msra.mxu0 %v147
    %157 = vmatprep.subr.mxu0 0.0
    %158 = vmatpush1.msra.mxu0 %v146
    %159 = vmatprep.subr.mxu0 0.0
    %160 = vmatpush1.msra.mxu0 %v145
    %161 = vmatprep.subr.mxu0 0.0
    %162 = vmatpush1.msra.mxu0 %v144
    %163 = vmatprep.subr.mxu0 0.0
    %164 = vmatpush1.msra.mxu0 %v143
    %165 = vmatprep.subr.mxu0 0.0
    %166 = vmatpush1.msra.mxu0 %v142
    %167 = vmatprep.subr.mxu0 0.0
    %168 = vmatpush1.msra.mxu0 %v141
    %169 = vmatprep.subr.mxu0 0.0
    %170 = vmatpush1.msra.mxu0 %v140
    %171 = vmatprep.subr.mxu0 0.0
    %172 = vmatpush1.msra.mxu0 %v139
    %173 = vmatprep.subr.mxu0 0.0
    %174 = vmatpush1.msra.mxu0 %v138
    %175 = vmatprep.subr.mxu0 0.0
    %176 = vmatpush1.msra.mxu0 %v137
    %177 = vmatprep.subr.mxu0 0.0
    %178 = vmatpush1.msra.mxu0 %v136
    %179 = vmatprep.subr.mxu0 0.0
    %180 = vmatpush1.msra.mxu0 %v135
    %181 = vmatprep.subr.mxu0 0.0
    %182 = vmatpush1.msra.mxu0 %v134
    %183 = vmatprep.subr.mxu0 0.0
    %184 = vmatpush1.msra.mxu0 %v133
    %185 = vmatprep.subr.mxu0 0.0
    %186 = vmatpush1.msra.mxu0 %v132
    %187 = vmatprep.subr.mxu0 0.0
    %188 = vmatpush2.msra.mxu0 0.0
    %189 = vmatprep.subr.mxu0 0.0
    %190 = vmatpush2.msra.mxu0 0.0
    %191 = vmatprep.subr.mxu0 0.0
    %192 = vmatpush2.msra.mxu0 0.0
    %193 = vmatprep.subr.mxu0 0.0
    %194 = vmatpush2.msra.mxu0 0.0
    %195 = vmatprep.subr.mxu0 0.0
    %196 = vmatpush2.msra.mxu0 0.0
    %197 = vmatprep.subr.mxu0 0.0
    %198 = vmatpush2.msra.mxu0 0.0
    %199 = vmatprep.subr.mxu0 0.0
    %200 = vmatpush2.msra.mxu0 0.0
    %201 = vmatprep.subr.mxu0 0.0
    %202 = vmatpush2.msra.mxu0 0.0
    %203 = vmatprep.subr.mxu0 0.0
    %204 = vmatpush2.msra.mxu0 0.0
    %205 = vmatprep.subr.mxu0 0.0
    %206 = vmatpush2.msra.mxu0 0.0
    %207 = vmatprep.subr.mxu0 0.0
    %208 = vmatpush2.msra.mxu0 0.0
    %209 = vmatprep.subr.mxu0 0.0
    %210 = vmatpush2.msra.mxu0 0.0
    %211 = vmatprep.subr.mxu0 0.0
    %212 = vmatpush2.msra.mxu0 0.0
    %213 = vmatprep.subr.mxu0 0.0
    %214 = vmatpush2.msra.mxu0 0.0
    %215 = vmatprep.subr.mxu0 0.0
    %216 = vmatpush2.msra.mxu0 0.0
    %217 = vmatprep.subr.mxu0 0.0
    %218 = vmatpush2.msra.mxu0 0.0
    %219 = vmatprep.mubr.f32.mxu0 0.0
    %220 = vmatmul.mubr.f32.gmra.mxu0 %v124
    %v221 = vpop.f32.mrf.mxu0
    %v222 = vadd.f32 %v153, %v221
    %v223 = vpop.f32.mrf.mxu0
    %224 = vmatprep.mubr.f32.mxu0 0.0
    %225 = vmatmul.mubr.f32.gmra.mxu0 %v125
    %v226 = vpop.f32.mrf.mxu0
    %v227 = vadd.f32 %v153, %v226
    %v228 = vpop.f32.mrf.mxu0
    %229 = vmatprep.mubr.f32.mxu0 0.0
    %230 = vmatmul.mubr.f32.gmra.mxu0 %v126
    %v231 = vpop.f32.mrf.mxu0
    %v232 = vadd.f32 %v153, %v231
    %v233 = vpop.f32.mrf.mxu0
    %234 = vmatprep.mubr.f32.mxu0 0.0
    %235 = vmatmul.mubr.f32.gmra.mxu0 %v127
    %v236 = vpop.f32.mrf.mxu0
    %v237 = vadd.f32 %v153, %v236
    %v238 = vpop.f32.mrf.mxu0
    %239 = vmatprep.mubr.f32.mxu0 0.0
    %240 = vmatmul.mubr.f32.gmra.mxu0 %v128
    %v241 = vpop.f32.mrf.mxu0
    %v242 = vadd.f32 %v153, %v241
    %v243 = vpop.f32.mrf.mxu0
    %244 = vmatprep.mubr.f32.mxu0 0.0
    %245 = vmatmul.mubr.f32.gmra.mxu0 %v129
    %v246 = vpop.f32.mrf.mxu0
    %v247 = vadd.f32 %v153, %v246
    %v248 = vpop.f32.mrf.mxu0
    %249 = vmatprep.mubr.f32.mxu0 0.0
    %250 = vmatmul.mubr.f32.gmra.mxu0 %v130
    %v251 = vpop.f32.mrf.mxu0
    %v252 = vadd.f32 %v153, %v251
    %v253 = vpop.f32.mrf.mxu0
    %254 = vmatprep.mubr.f32.mxu0 0.0
    %255 = vmatmul.mubr.f32.gmra.mxu0 %v131
    %v256 = vpop.f32.mrf.mxu0
    %v257 = vadd.f32 %v153, %v256
    %v258 = vpop.f32.mrf.mxu0
    %259 = vdwg.mxu0
    %260 = vst [vmem:[#allocation2] sm:$0xff] %v222
    %261 = vst [vmem:[#allocation2 + $0x8] sm:$0xff] %v227
    %262 = vst [vmem:[#allocation2 + $0x10] sm:$0xff] %v232
    %263 = vst [vmem:[#allocation2 + $0x18] sm:$0xff] %v237
    %264 = vst [vmem:[#allocation2 + $0x20] sm:$0xff] %v242
    %265 = vst [vmem:[#allocation2 + $0x28] sm:$0xff] %v247
    %266 = vst [vmem:[#allocation2 + $0x30] sm:$0xff] %v252
    %267 = vst [vmem:[#allocation2 + $0x38] sm:$0xff] %v257
    %v268 = vld [vmem:[#allocation7] sm:$0xff]
    %v269 = vld [vmem:[#allocation7 + $0x8] sm:$0xff]
    %v270 = vld [vmem:[#allocation7 + $0x10] sm:$0xff]
    %v271 = vld [vmem:[#allocation7 + $0x18] sm:$0xff]
    %v272 = vlaneseq
    %v273 = vand.u32 %v272, 127
    %vm274 = vcmp.ge.s32.totalorder %v273, 64
    %vm275 = vcmp.lt.s32.totalorder %v273, 96
    %vm276 = vmand %vm274, %vm275
    %v277 = vsel %vm276, 1.0, 0.5
    %v278 = vsel %vm276, 0.0, 0.5
    %v279 = vld [vmem:[#allocation2] sm:$0xff]
    %vm280 = vcmask 261120
    %v282 = vsel %vm280, 0.0, 0
    %284 = vmatprep.subr.mxu0 0.0
    %285 = vmatpush1.msra.mxu0 0.0
    %286 = vmatprep.subr.mxu0 0.0
    %287 = vmatpush1.msra.mxu0 0.0
    %288 = vmatprep.subr.mxu0 0.0
    %289 = vmatpush1.msra.mxu0 0.0
    %290 = vmatprep.subr.mxu0 0.0
    %291 = vmatpush1.msra.mxu0 0.0
    %292 = vmatprep.subr.mxu0 0.0
    %293 = vmatpush1.msra.mxu0 0.0
    %294 = vmatprep.subr.mxu0 0.0
    %295 = vmatpush1.msra.mxu0 0.0
    %296 = vmatprep.subr.mxu0 0.0
    %297 = vmatpush1.msra.mxu0 0.0
    %298 = vmatprep.subr.mxu0 0.0
    %299 = vmatpush1.msra.mxu0 0.0
    %300 = vmatprep.subr.mxu0 0.0
    %301 = vmatpush1.msra.mxu0 0.0
    %302 = vmatprep.subr.mxu0 0.0
    %303 = vmatpush1.msra.mxu0 0.0
    %304 = vmatprep.subr.mxu0 0.0
    %305 = vmatpush1.msra.mxu0 0.0
    %306 = vmatprep.subr.mxu0 0.0
    %307 = vmatpush1.msra.mxu0 0.0
    %308 = vmatprep.subr.mxu0 0.0
    %309 = vmatpush1.msra.mxu0 %v271
    %310 = vmatprep.subr.mxu0 0.0
    %311 = vmatpush1.msra.mxu0 %v270
    %312 = vmatprep.subr.mxu0 0.0
    %313 = vmatpush1.msra.mxu0 %v269
    %314 = vmatprep.subr.mxu0 0.0
    %315 = vmatpush1.msra.mxu0 %v268
    %316 = vmatprep.subr.mxu0 0.0
    %317 = vmatpush2.msra.mxu0 0.0
    %318 = vmatprep.subr.mxu0 0.0
    %319 = vmatpush2.msra.mxu0 0.0
    %320 = vmatprep.subr.mxu0 0.0
    %321 = vmatpush2.msra.mxu0 0.0
    %322 = vmatprep.subr.mxu0 0.0
    %323 = vmatpush2.msra.mxu0 0.0
    %324 = vmatprep.subr.mxu0 0.0
    %325 = vmatpush2.msra.mxu0 0.0
    %326 = vmatprep.subr.mxu0 0.0
    %327 = vmatpush2.msra.mxu0 0.0
    %328 = vmatprep.subr.mxu0 0.0
    %329 = vmatpush2.msra.mxu0 0.0
    %330 = vmatprep.subr.mxu0 0.0
    %331 = vmatpush2.msra.mxu0 0.0
    %332 = vmatprep.subr.mxu0 0.0
    %333 = vmatpush2.msra.mxu0 0.0
    %334 = vmatprep.subr.mxu0 0.0
    %335 = vmatpush2.msra.mxu0 0.0
    %336 = vmatprep.subr.mxu0 0.0
    %337 = vmatpush2.msra.mxu0 0.0
    %338 = vmatprep.subr.mxu0 0.0
    %339 = vmatpush2.msra.mxu0 0.0
    %340 = vmatprep.subr.mxu0 0.0
    %341 = vmatpush2.msra.mxu0 0.0
    %342 = vmatprep.subr.mxu0 0.0
    %343 = vmatpush2.msra.mxu0 0.0
    %344 = vmatprep.subr.mxu0 0.0
    %345 = vmatpush2.msra.mxu0 0.0
    %346 = vmatprep.subr.mxu0 0.0
    %347 = vmatpush2.msra.mxu0 0.0
    %348 = vmatprep.mubr.f32.mxu0 0.0
    %349 = vmatmul.mubr.f32.gmra.mxu0 %v282
    %v350 = vpop.f32.mrf.mxu0
    %v351 = vadd.f32 0.0, %v350
    %v352 = vpop.f32.mrf.mxu0
    %353 = vdwg.mxu0
    %v354 = vadd.f32 %v279, %v351
    %v355 = vmul.f32 %v277, %v354
    %v356 = vtanh.pop %v355
    %v357 = vmul.f32 %v277, %v356
    %v358 = vadd.f32 %v357, %v278
    %v359 = vmul.f32 %v358, 0.0
    %361 = vrot.lane.b32.xlu0 %v358, 64
    %v362 = vpop.permute.xlu0 %361
    %v364 = vmul.f32 %v358, %v362
    %366 = vrot.lane.b32.xlu0 %v364, 32
    %v367 = vpop.permute.xlu0 %366
    %v369 = vadd.f32 %v359, %v367
    %v370 = vtanh.pop %v369
    %372 = vrot.lane.b32.xlu0 %v370, 64
    %v373 = vpop.permute.xlu0 %372
    %v375 = vmul.f32 %v358, %v373
    %v376 = vld [vmem:[#allocation2 + $0x8] sm:$0xff]
    %378 = vrot.lane.b32.xlu0 %v375, 32
    %v379 = vpop.permute.xlu0 %378
    %v380 = vsel %vm280, %v379, 0
    %382 = vmatprep.subr.mxu0 0.0
    %383 = vmatpush1.msra.mxu0 0.0
    %384 = vmatprep.subr.mxu0 0.0
    %385 = vmatpush1.msra.mxu0 0.0
    %386 = vmatprep.subr.mxu0 0.0
    %387 = vmatpush1.msra.mxu0 0.0
    %388 = vmatprep.subr.mxu0 0.0
    %389 = vmatpush1.msra.mxu0 0.0
    %390 = vmatprep.subr.mxu0 0.0
    %391 = vmatpush1.msra.mxu0 0.0
    %392 = vmatprep.subr.mxu0 0.0
    %393 = vmatpush1.msra.mxu0 0.0
    %394 = vmatprep.subr.mxu0 0.0
    %395 = vmatpush1.msra.mxu0 0.0
    %396 = vmatprep.subr.mxu0 0.0
    %397 = vmatpush1.msra.mxu0 0.0
    %398 = vmatprep.subr.mxu0 0.0
    %399 = vmatpush1.msra.mxu0 0.0
    %400 = vmatprep.subr.mxu0 0.0
    %401 = vmatpush1.msra.mxu0 0.0
    %402 = vmatprep.subr.mxu0 0.0
    %403 = vmatpush1.msra.mxu0 0.0
    %404 = vmatprep.subr.mxu0 0.0
    %405 = vmatpush1.msra.mxu0 0.0
    %406 = vmatprep.subr.mxu0 0.0
    %407 = vmatpush1.msra.mxu0 %v271
    %408 = vmatprep.subr.mxu0 0.0
    %409 = vmatpush1.msra.mxu0 %v270
    %410 = vmatprep.subr.mxu0 0.0
    %411 = vmatpush1.msra.mxu0 %v269
    %412 = vmatprep.subr.mxu0 0.0
    %413 = vmatpush1.msra.mxu0 %v268
    %414 = vmatprep.subr.mxu0 0.0
    %415 = vmatpush2.msra.mxu0 0.0
    %416 = vmatprep.subr.mxu0 0.0
    %417 = vmatpush2.msra.mxu0 0.0
    %418 = vmatprep.subr.mxu0 0.0
    %419 = vmatpush2.msra.mxu0 0.0
    %420 = vmatprep.subr.mxu0 0.0
    %421 = vmatpush2.msra.mxu0 0.0
    %422 = vmatprep.subr.mxu0 0.0
    %423 = vmatpush2.msra.mxu0 0.0
    %424 = vmatprep.subr.mxu0 0.0
    %425 = vmatpush2.msra.mxu0 0.0
    %426 = vmatprep.subr.mxu0 0.0
    %427 = vmatpush2.msra.mxu0 0.0
    %428 = vmatprep.subr.mxu0 0.0
    %429 = vmatpush2.msra.mxu0 0.0
    %430 = vmatprep.subr.mxu0 0.0
    %431 = vmatpush2.msra.mxu0 0.0
    %432 = vmatprep.subr.mxu0 0.0
    %433 = vmatpush2.msra.mxu0 0.0
    %434 = vmatprep.subr.mxu0 0.0
    %435 = vmatpush2.msra.mxu0 0.0
    %436 = vmatprep.subr.mxu0 0.0
    %437 = vmatpush2.msra.mxu0 0.0
    %438 = vmatprep.subr.mxu0 0.0
    %439 = vmatpush2.msra.mxu0 0.0
    %440 = vmatprep.subr.mxu0 0.0
    %441 = vmatpush2.msra.mxu0 0.0
    %442 = vmatprep.subr.mxu0 0.0
    %443 = vmatpush2.msra.mxu0 0.0
    %444 = vmatprep.subr.mxu0 0.0
    %445 = vmatpush2.msra.mxu0 0.0
    %446 = vmatprep.mubr.f32.mxu0 0.0
    %447 = vmatmul.mubr.f32.gmra.mxu0 %v380
    %v448 = vpop.f32.mrf.mxu0
    %v449 = vadd.f32 0.0, %v448
    %v450 = vpop.f32.mrf.mxu0
    %451 = vdwg.mxu0
    %v452 = vadd.f32 %v376, %v449
    %v453 = vmul.f32 %v277, %v452
    %v454 = vtanh.pop %v453
    %v455 = vmul.f32 %v277, %v454
    %v456 = vadd.f32 %v455, %v278
    %v457 = vmul.f32 %v456, %v369
    %459 = vrot.lane.b32.xlu0 %v456, 64
    %v460 = vpop.permute.xlu0 %459
    %v462 = vmul.f32 %v456, %v460
    %464 = vrot.lane.b32.xlu0 %v462, 32
    %v465 = vpop.permute.xlu0 %464
    %v467 = vadd.f32 %v457, %v465
    %v468 = vtanh.pop %v467
    %470 = vrot.lane.b32.xlu0 %v468, 64
    %v471 = vpop.permute.xlu0 %470
    %v473 = vmul.f32 %v456, %v471
    %v474 = vld [vmem:[#allocation2 + $0x10] sm:$0xff]
    %476 = vrot.lane.b32.xlu0 %v473, 32
    %v477 = vpop.permute.xlu0 %476
    %v478 = vsel %vm280, %v477, 0
    %480 = vmatprep.subr.mxu0 0.0
    %481 = vmatpush1.msra.mxu0 0.0
    %482 = vmatprep.subr.mxu0 0.0
    %483 = vmatpush1.msra.mxu0 0.0
    %484 = vmatprep.subr.mxu0 0.0
    %485 = vmatpush1.msra.mxu0 0.0
    %486 = vmatprep.subr.mxu0 0.0
    %487 = vmatpush1.msra.mxu0 0.0
    %488 = vmatprep.subr.mxu0 0.0
    %489 = vmatpush1.msra.mxu0 0.0
    %490 = vmatprep.subr.mxu0 0.0
    %491 = vmatpush1.msra.mxu0 0.0
    %492 = vmatprep.subr.mxu0 0.0
    %493 = vmatpush1.msra.mxu0 0.0
    %494 = vmatprep.subr.mxu0 0.0
    %495 = vmatpush1.msra.mxu0 0.0
    %496 = vmatprep.subr.mxu0 0.0
    %497 = vmatpush1.msra.mxu0 0.0
    %498 = vmatprep.subr.mxu0 0.0
    %499 = vmatpush1.msra.mxu0 0.0
    %500 = vmatprep.subr.mxu0 0.0
    %501 = vmatpush1.msra.mxu0 0.0
    %502 = vmatprep.subr.mxu0 0.0
    %503 = vmatpush1.msra.mxu0 0.0
    %504 = vmatprep.subr.mxu0 0.0
    %505 = vmatpush1.msra.mxu0 %v271
    %506 = vmatprep.subr.mxu0 0.0
    %507 = vmatpush1.msra.mxu0 %v270
    %508 = vmatprep.subr.mxu0 0.0
    %509 = vmatpush1.msra.mxu0 %v269
    %510 = vmatprep.subr.mxu0 0.0
    %511 = vmatpush1.msra.mxu0 %v268
    %512 = vmatprep.subr.mxu0 0.0
    %513 = vmatpush2.msra.mxu0 0.0
    %514 = vmatprep.subr.mxu0 0.0
    %515 = vmatpush2.msra.mxu0 0.0
    %516 = vmatprep.subr.mxu0 0.0
    %517 = vmatpush2.msra.mxu0 0.0
    %518 = vmatprep.subr.mxu0 0.0
    %519 = vmatpush2.msra.mxu0 0.0
    %520 = vmatprep.subr.mxu0 0.0
    %521 = vmatpush2.msra.mxu0 0.0
    %522 = vmatprep.subr.mxu0 0.0
    %523 = vmatpush2.msra.mxu0 0.0
    %524 = vmatprep.subr.mxu0 0.0
    %525 = vmatpush2.msra.mxu0 0.0
    %526 = vmatprep.subr.mxu0 0.0
    %527 = vmatpush2.msra.mxu0 0.0
    %528 = vmatprep.subr.mxu0 0.0
    %529 = vmatpush2.msra.mxu0 0.0
    %530 = vmatprep.subr.mxu0 0.0
    %531 = vmatpush2.msra.mxu0 0.0
    %532 = vmatprep.subr.mxu0 0.0
    %533 = vmatpush2.msra.mxu0 0.0
    %534 = vmatprep.subr.mxu0 0.0
    %535 = vmatpush2.msra.mxu0 0.0
    %536 = vmatprep.subr.mxu0 0.0
    %537 = vmatpush2.msra.mxu0 0.0
    %538 = vmatprep.subr.mxu0 0.0
    %539 = vmatpush2.msra.mxu0 0.0
    %540 = vmatprep.subr.mxu0 0.0
    %541 = vmatpush2.msra.mxu0 0.0
    %542 = vmatprep.subr.mxu0 0.0
    %543 = vmatpush2.msra.mxu0 0.0
    %544 = vmatprep.mubr.f32.mxu0 0.0
    %545 = vmatmul.mubr.f32.gmra.mxu0 %v478
    %v546 = vpop.f32.mrf.mxu0
    %v547 = vadd.f32 0.0, %v546
    %v548 = vpop.f32.mrf.mxu0
    %549 = vdwg.mxu0
    %v550 = vadd.f32 %v474, %v547
    %v551 = vmul.f32 %v277, %v550
    %v552 = vtanh.pop %v551
    %v553 = vmul.f32 %v277, %v552
    %v554 = vadd.f32 %v553, %v278
    %v555 = vmul.f32 %v554, %v467
    %557 = vrot.lane.b32.xlu0 %v554, 64
    %v558 = vpop.permute.xlu0 %557
    %v560 = vmul.f32 %v554, %v558
    %562 = vrot.lane.b32.xlu0 %v560, 32
    %v563 = vpop.permute.xlu0 %562
    %v565 = vadd.f32 %v555, %v563
    %v566 = vtanh.pop %v565
    %568 = vrot.lane.b32.xlu0 %v566, 64
    %v569 = vpop.permute.xlu0 %568
    %v571 = vmul.f32 %v554, %v569
    %v572 = vld [vmem:[#allocation2 + $0x18] sm:$0xff]
    %574 = vrot.lane.b32.xlu0 %v571, 32
    %v575 = vpop.permute.xlu0 %574
    %v576 = vsel %vm280, %v575, 0
    %578 = vmatprep.subr.mxu0 0.0
    %579 = vmatpush1.msra.mxu0 0.0
    %580 = vmatprep.subr.mxu0 0.0
    %581 = vmatpush1.msra.mxu0 0.0
    %582 = vmatprep.subr.mxu0 0.0
    %583 = vmatpush1.msra.mxu0 0.0
    %584 = vmatprep.subr.mxu0 0.0
    %585 = vmatpush1.msra.mxu0 0.0
    %586 = vmatprep.subr.mxu0 0.0
    %587 = vmatpush1.msra.mxu0 0.0
    %588 = vmatprep.subr.mxu0 0.0
    %589 = vmatpush1.msra.mxu0 0.0
    %590 = vmatprep.subr.mxu0 0.0
    %591 = vmatpush1.msra.mxu0 0.0
    %592 = vmatprep.subr.mxu0 0.0
    %593 = vmatpush1.msra.mxu0 0.0
    %594 = vmatprep.subr.mxu0 0.0
    %595 = vmatpush1.msra.mxu0 0.0
    %596 = vmatprep.subr.mxu0 0.0
    %597 = vmatpush1.msra.mxu0 0.0
    %598 = vmatprep.subr.mxu0 0.0
    %599 = vmatpush1.msra.mxu0 0.0
    %600 = vmatprep.subr.mxu0 0.0
    %601 = vmatpush1.msra.mxu0 0.0
    %602 = vmatprep.subr.mxu0 0.0
    %603 = vmatpush1.msra.mxu0 %v271
    %604 = vmatprep.subr.mxu0 0.0
    %605 = vmatpush1.msra.mxu0 %v270
    %606 = vmatprep.subr.mxu0 0.0
    %607 = vmatpush1.msra.mxu0 %v269
    %608 = vmatprep.subr.mxu0 0.0
    %609 = vmatpush1.msra.mxu0 %v268
    %610 = vmatprep.subr.mxu0 0.0
    %611 = vmatpush2.msra.mxu0 0.0
    %612 = vmatprep.subr.mxu0 0.0
    %613 = vmatpush2.msra.mxu0 0.0
    %614 = vmatprep.subr.mxu0 0.0
    %615 = vmatpush2.msra.mxu0 0.0
    %616 = vmatprep.subr.mxu0 0.0
    %617 = vmatpush2.msra.mxu0 0.0
    %618 = vmatprep.subr.mxu0 0.0
    %619 = vmatpush2.msra.mxu0 0.0
    %620 = vmatprep.subr.mxu0 0.0
    %621 = vmatpush2.msra.mxu0 0.0
    %622 = vmatprep.subr.mxu0 0.0
    %623 = vmatpush2.msra.mxu0 0.0
    %624 = vmatprep.subr.mxu0 0.0
    %625 = vmatpush2.msra.mxu0 0.0
    %626 = vmatprep.subr.mxu0 0.0
    %627 = vmatpush2.msra.mxu0 0.0
    %628 = vmatprep.subr.mxu0 0.0
    %629 = vmatpush2.msra.mxu0 0.0
    %630 = vmatprep.subr.mxu0 0.0
    %631 = vmatpush2.msra.mxu0 0.0
    %632 = vmatprep.subr.mxu0 0.0
    %633 = vmatpush2.msra.mxu0 0.0
    %634 = vmatprep.subr.mxu0 0.0
    %635 = vmatpush2.msra.mxu0 0.0
    %636 = vmatprep.subr.mxu0 0.0
    %637 = vmatpush2.msra.mxu0 0.0
    %638 = vmatprep.subr.mxu0 0.0
    %639 = vmatpush2.msra.mxu0 0.0
    %640 = vmatprep.subr.mxu0 0.0
    %641 = vmatpush2.msra.mxu0 0.0
    %642 = vmatprep.mubr.f32.mxu0 0.0
    %643 = vmatmul.mubr.f32.gmra.mxu0 %v576
    %v644 = vpop.f32.mrf.mxu0
    %v645 = vadd.f32 0.0, %v644
    %v646 = vpop.f32.mrf.mxu0
    %647 = vdwg.mxu0
    %v648 = vadd.f32 %v572, %v645
    %v649 = vmul.f32 %v277, %v648
    %v650 = vtanh.pop %v649
    %v651 = vmul.f32 %v277, %v650
    %v652 = vadd.f32 %v651, %v278
    %v653 = vmul.f32 %v652, %v565
    %655 = vrot.lane.b32.xlu0 %v652, 64
    %v656 = vpop.permute.xlu0 %655
    %v658 = vmul.f32 %v652, %v656
    %660 = vrot.lane.b32.xlu0 %v658, 32
    %v661 = vpop.permute.xlu0 %660
    %v663 = vadd.f32 %v653, %v661
    %v664 = vtanh.pop %v663
    %666 = vrot.lane.b32.xlu0 %v664, 64
    %v667 = vpop.permute.xlu0 %666
    %v669 = vmul.f32 %v652, %v667
    %v670 = vld [vmem:[#allocation2 + $0x20] sm:$0xff]
    %672 = vrot.lane.b32.xlu0 %v669, 32
    %v673 = vpop.permute.xlu0 %672
    %v674 = vsel %vm280, %v673, 0
    %676 = vmatprep.subr.mxu0 0.0
    %677 = vmatpush1.msra.mxu0 0.0
    %678 = vmatprep.subr.mxu0 0.0
    %679 = vmatpush1.msra.mxu0 0.0
    %680 = vmatprep.subr.mxu0 0.0
    %681 = vmatpush1.msra.mxu0 0.0
    %682 = vmatprep.subr.mxu0 0.0
    %683 = vmatpush1.msra.mxu0 0.0
    %684 = vmatprep.subr.mxu0 0.0
    %685 = vmatpush1.msra.mxu0 0.0
    %686 = vmatprep.subr.mxu0 0.0
    %687 = vmatpush1.msra.mxu0 0.0
    %688 = vmatprep.subr.mxu0 0.0
    %689 = vmatpush1.msra.mxu0 0.0
    %690 = vmatprep.subr.mxu0 0.0
    %691 = vmatpush1.msra.mxu0 0.0
    %692 = vmatprep.subr.mxu0 0.0
    %693 = vmatpush1.msra.mxu0 0.0
    %694 = vmatprep.subr.mxu0 0.0
    %695 = vmatpush1.msra.mxu0 0.0
    %696 = vmatprep.subr.mxu0 0.0
    %697 = vmatpush1.msra.mxu0 0.0
    %698 = vmatprep.subr.mxu0 0.0
    %699 = vmatpush1.msra.mxu0 0.0
    %700 = vmatprep.subr.mxu0 0.0
    %701 = vmatpush1.msra.mxu0 %v271
    %702 = vmatprep.subr.mxu0 0.0
    %703 = vmatpush1.msra.mxu0 %v270
    %704 = vmatprep.subr.mxu0 0.0
    %705 = vmatpush1.msra.mxu0 %v269
    %706 = vmatprep.subr.mxu0 0.0
    %707 = vmatpush1.msra.mxu0 %v268
    %708 = vmatprep.subr.mxu0 0.0
    %709 = vmatpush2.msra.mxu0 0.0
    %710 = vmatprep.subr.mxu0 0.0
    %711 = vmatpush2.msra.mxu0 0.0
    %712 = vmatprep.subr.mxu0 0.0
    %713 = vmatpush2.msra.mxu0 0.0
    %714 = vmatprep.subr.mxu0 0.0
    %715 = vmatpush2.msra.mxu0 0.0
    %716 = vmatprep.subr.mxu0 0.0
    %717 = vmatpush2.msra.mxu0 0.0
    %718 = vmatprep.subr.mxu0 0.0
    %719 = vmatpush2.msra.mxu0 0.0
    %720 = vmatprep.subr.mxu0 0.0
    %721 = vmatpush2.msra.mxu0 0.0
    %722 = vmatprep.subr.mxu0 0.0
    %723 = vmatpush2.msra.mxu0 0.0
    %724 = vmatprep.subr.mxu0 0.0
    %725 = vmatpush2.msra.mxu0 0.0
    %726 = vmatprep.subr.mxu0 0.0
    %727 = vmatpush2.msra.mxu0 0.0
    %728 = vmatprep.subr.mxu0 0.0
    %729 = vmatpush2.msra.mxu0 0.0
    %730 = vmatprep.subr.mxu0 0.0
    %731 = vmatpush2.msra.mxu0 0.0
    %732 = vmatprep.subr.mxu0 0.0
    %733 = vmatpush2.msra.mxu0 0.0
    %734 = vmatprep.subr.mxu0 0.0
    %735 = vmatpush2.msra.mxu0 0.0
    %736 = vmatprep.subr.mxu0 0.0
    %737 = vmatpush2.msra.mxu0 0.0
    %738 = vmatprep.subr.mxu0 0.0
    %739 = vmatpush2.msra.mxu0 0.0
    %740 = vmatprep.mubr.f32.mxu0 0.0
    %741 = vmatmul.mubr.f32.gmra.mxu0 %v674
    %v742 = vpop.f32.mrf.mxu0
    %v743 = vadd.f32 0.0, %v742
    %v744 = vpop.f32.mrf.mxu0
    %745 = vdwg.mxu0
    %v746 = vadd.f32 %v670, %v743
    %v747 = vmul.f32 %v277, %v746
    %v748 = vtanh.pop %v747
    %v749 = vmul.f32 %v277, %v748
    %v750 = vadd.f32 %v749, %v278
    %v751 = vmul.f32 %v750, %v663
    %753 = vrot.lane.b32.xlu0 %v750, 64
    %v754 = vpop.permute.xlu0 %753
    %v756 = vmul.f32 %v750, %v754
    %758 = vrot.lane.b32.xlu0 %v756, 32
    %v759 = vpop.permute.xlu0 %758
    %v761 = vadd.f32 %v751, %v759
    %v762 = vtanh.pop %v761
    %764 = vrot.lane.b32.xlu0 %v762, 64
    %v765 = vpop.permute.xlu0 %764
    %v767 = vmul.f32 %v750, %v765
    %v768 = vld [vmem:[#allocation2 + $0x28] sm:$0xff]
    %770 = vrot.lane.b32.xlu0 %v767, 32
    %v771 = vpop.permute.xlu0 %770
    %v772 = vsel %vm280, %v771, 0
    %774 = vmatprep.subr.mxu0 0.0
    %775 = vmatpush1.msra.mxu0 0.0
    %776 = vmatprep.subr.mxu0 0.0
    %777 = vmatpush1.msra.mxu0 0.0
    %778 = vmatprep.subr.mxu0 0.0
    %779 = vmatpush1.msra.mxu0 0.0
    %780 = vmatprep.subr.mxu0 0.0
    %781 = vmatpush1.msra.mxu0 0.0
    %782 = vmatprep.subr.mxu0 0.0
    %783 = vmatpush1.msra.mxu0 0.0
    %784 = vmatprep.subr.mxu0 0.0
    %785 = vmatpush1.msra.mxu0 0.0
    %786 = vmatprep.subr.mxu0 0.0
    %787 = vmatpush1.msra.mxu0 0.0
    %788 = vmatprep.subr.mxu0 0.0
    %789 = vmatpush1.msra.mxu0 0.0
    %790 = vmatprep.subr.mxu0 0.0
    %791 = vmatpush1.msra.mxu0 0.0
    %792 = vmatprep.subr.mxu0 0.0
    %793 = vmatpush1.msra.mxu0 0.0
    %794 = vmatprep.subr.mxu0 0.0
    %795 = vmatpush1.msra.mxu0 0.0
    %796 = vmatprep.subr.mxu0 0.0
    %797 = vmatpush1.msra.mxu0 0.0
    %798 = vmatprep.subr.mxu0 0.0
    %799 = vmatpush1.msra.mxu0 %v271
    %800 = vmatprep.subr.mxu0 0.0
    %801 = vmatpush1.msra.mxu0 %v270
    %802 = vmatprep.subr.mxu0 0.0
    %803 = vmatpush1.msra.mxu0 %v269
    %804 = vmatprep.subr.mxu0 0.0
    %805 = vmatpush1.msra.mxu0 %v268
    %806 = vmatprep.subr.mxu0 0.0
    %807 = vmatpush2.msra.mxu0 0.0
    %808 = vmatprep.subr.mxu0 0.0
    %809 = vmatpush2.msra.mxu0 0.0
    %810 = vmatprep.subr.mxu0 0.0
    %811 = vmatpush2.msra.mxu0 0.0
    %812 = vmatprep.subr.mxu0 0.0
    %813 = vmatpush2.msra.mxu0 0.0
    %814 = vmatprep.subr.mxu0 0.0
    %815 = vmatpush2.msra.mxu0 0.0
    %816 = vmatprep.subr.mxu0 0.0
    %817 = vmatpush2.msra.mxu0 0.0
    %818 = vmatprep.subr.mxu0 0.0
    %819 = vmatpush2.msra.mxu0 0.0
    %820 = vmatprep.subr.mxu0 0.0
    %821 = vmatpush2.msra.mxu0 0.0
    %822 = vmatprep.subr.mxu0 0.0
    %823 = vmatpush2.msra.mxu0 0.0
    %824 = vmatprep.subr.mxu0 0.0
    %825 = vmatpush2.msra.mxu0 0.0
    %826 = vmatprep.subr.mxu0 0.0
    %827 = vmatpush2.msra.mxu0 0.0
    %828 = vmatprep.subr.mxu0 0.0
    %829 = vmatpush2.msra.mxu0 0.0
    %830 = vmatprep.subr.mxu0 0.0
    %831 = vmatpush2.msra.mxu0 0.0
    %832 = vmatprep.subr.mxu0 0.0
    %833 = vmatpush2.msra.mxu0 0.0
    %834 = vmatprep.subr.mxu0 0.0
    %835 = vmatpush2.msra.mxu0 0.0
    %836 = vmatprep.subr.mxu0 0.0
    %837 = vmatpush2.msra.mxu0 0.0
    %838 = vmatprep.mubr.f32.mxu0 0.0
    %839 = vmatmul.mubr.f32.gmra.mxu0 %v772
    %v840 = vpop.f32.mrf.mxu0
    %v841 = vadd.f32 0.0, %v840
    %v842 = vpop.f32.mrf.mxu0
    %843 = vdwg.mxu0
    %v844 = vadd.f32 %v768, %v841
    %v845 = vmul.f32 %v277, %v844
    %v846 = vtanh.pop %v845
    %v847 = vmul.f32 %v277, %v846
    %v848 = vadd.f32 %v847, %v278
    %v849 = vmul.f32 %v848, %v761
    %851 = vrot.lane.b32.xlu0 %v848, 64
    %v852 = vpop.permute.xlu0 %851
    %v854 = vmul.f32 %v848, %v852
    %856 = vrot.lane.b32.xlu0 %v854, 32
    %v857 = vpop.permute.xlu0 %856
    %v859 = vadd.f32 %v849, %v857
    %v860 = vtanh.pop %v859
    %862 = vrot.lane.b32.xlu0 %v860, 64
    %v863 = vpop.permute.xlu0 %862
    %v865 = vmul.f32 %v848, %v863
    %v866 = vld [vmem:[#allocation2 + $0x30] sm:$0xff]
    %868 = vrot.lane.b32.xlu0 %v865, 32
    %v869 = vpop.permute.xlu0 %868
    %v870 = vsel %vm280, %v869, 0
    %872 = vmatprep.subr.mxu0 0.0
    %873 = vmatpush1.msra.mxu0 0.0
    %874 = vmatprep.subr.mxu0 0.0
    %875 = vmatpush1.msra.mxu0 0.0
    %876 = vmatprep.subr.mxu0 0.0
    %877 = vmatpush1.msra.mxu0 0.0
    %878 = vmatprep.subr.mxu0 0.0
    %879 = vmatpush1.msra.mxu0 0.0
    %880 = vmatprep.subr.mxu0 0.0
    %881 = vmatpush1.msra.mxu0 0.0
    %882 = vmatprep.subr.mxu0 0.0
    %883 = vmatpush1.msra.mxu0 0.0
    %884 = vmatprep.subr.mxu0 0.0
    %885 = vmatpush1.msra.mxu0 0.0
    %886 = vmatprep.subr.mxu0 0.0
    %887 = vmatpush1.msra.mxu0 0.0
    %888 = vmatprep.subr.mxu0 0.0
    %889 = vmatpush1.msra.mxu0 0.0
    %890 = vmatprep.subr.mxu0 0.0
    %891 = vmatpush1.msra.mxu0 0.0
    %892 = vmatprep.subr.mxu0 0.0
    %893 = vmatpush1.msra.mxu0 0.0
    %894 = vmatprep.subr.mxu0 0.0
    %895 = vmatpush1.msra.mxu0 0.0
    %896 = vmatprep.subr.mxu0 0.0
    %897 = vmatpush1.msra.mxu0 %v271
    %898 = vmatprep.subr.mxu0 0.0
    %899 = vmatpush1.msra.mxu0 %v270
    %900 = vmatprep.subr.mxu0 0.0
    %901 = vmatpush1.msra.mxu0 %v269
    %902 = vmatprep.subr.mxu0 0.0
    %903 = vmatpush1.msra.mxu0 %v268
    %904 = vmatprep.subr.mxu0 0.0
    %905 = vmatpush2.msra.mxu0 0.0
    %906 = vmatprep.subr.mxu0 0.0
    %907 = vmatpush2.msra.mxu0 0.0
    %908 = vmatprep.subr.mxu0 0.0
    %909 = vmatpush2.msra.mxu0 0.0
    %910 = vmatprep.subr.mxu0 0.0
    %911 = vmatpush2.msra.mxu0 0.0
    %912 = vmatprep.subr.mxu0 0.0
    %913 = vmatpush2.msra.mxu0 0.0
    %914 = vmatprep.subr.mxu0 0.0
    %915 = vmatpush2.msra.mxu0 0.0
    %916 = vmatprep.subr.mxu0 0.0
    %917 = vmatpush2.msra.mxu0 0.0
    %918 = vmatprep.subr.mxu0 0.0
    %919 = vmatpush2.msra.mxu0 0.0
    %920 = vmatprep.subr.mxu0 0.0
    %921 = vmatpush2.msra.mxu0 0.0
    %922 = vmatprep.subr.mxu0 0.0
    %923 = vmatpush2.msra.mxu0 0.0
    %924 = vmatprep.subr.mxu0 0.0
    %925 = vmatpush2.msra.mxu0 0.0
    %926 = vmatprep.subr.mxu0 0.0
    %927 = vmatpush2.msra.mxu0 0.0
    %928 = vmatprep.subr.mxu0 0.0
    %929 = vmatpush2.msra.mxu0 0.0
    %930 = vmatprep.subr.mxu0 0.0
    %931 = vmatpush2.msra.mxu0 0.0
    %932 = vmatprep.subr.mxu0 0.0
    %933 = vmatpush2.msra.mxu0 0.0
    %934 = vmatprep.subr.mxu0 0.0
    %935 = vmatpush2.msra.mxu0 0.0
    %936 = vmatprep.mubr.f32.mxu0 0.0
    %937 = vmatmul.mubr.f32.gmra.mxu0 %v870
    %v938 = vpop.f32.mrf.mxu0
    %v939 = vadd.f32 0.0, %v938
    %v940 = vpop.f32.mrf.mxu0
    %941 = vdwg.mxu0
    %v942 = vadd.f32 %v866, %v939
    %v943 = vmul.f32 %v277, %v942
    %v944 = vtanh.pop %v943
    %v945 = vmul.f32 %v277, %v944
    %v946 = vadd.f32 %v945, %v278
    %v947 = vmul.f32 %v946, %v859
    %949 = vrot.lane.b32.xlu0 %v946, 64
    %v950 = vpop.permute.xlu0 %949
    %v952 = vmul.f32 %v946, %v950
    %954 = vrot.lane.b32.xlu0 %v952, 32
    %v955 = vpop.permute.xlu0 %954
    %v957 = vadd.f32 %v947, %v955
    %v958 = vtanh.pop %v957
    %960 = vrot.lane.b32.xlu0 %v958, 64
    %v961 = vpop.permute.xlu0 %960
    %v963 = vmul.f32 %v946, %v961
    %v964 = vld [vmem:[#allocation2 + $0x38] sm:$0xff]
    %966 = vrot.lane.b32.xlu0 %v963, 32
    %v967 = vpop.permute.xlu0 %966
    %v968 = vsel %vm280, %v967, 0
    %970 = vmatprep.subr.mxu0 0.0
    %971 = vmatpush1.msra.mxu0 0.0
    %972 = vmatprep.subr.mxu0 0.0
    %973 = vmatpush1.msra.mxu0 0.0
    %974 = vmatprep.subr.mxu0 0.0
    %975 = vmatpush1.msra.mxu0 0.0
    %976 = vmatprep.subr.mxu0 0.0
    %977 = vmatpush1.msra.mxu0 0.0
    %978 = vmatprep.subr.mxu0 0.0
    %979 = vmatpush1.msra.mxu0 0.0
    %980 = vmatprep.subr.mxu0 0.0
    %981 = vmatpush1.msra.mxu0 0.0
    %982 = vmatprep.subr.mxu0 0.0
    %983 = vmatpush1.msra.mxu0 0.0
    %984 = vmatprep.subr.mxu0 0.0
    %985 = vmatpush1.msra.mxu0 0.0
    %986 = vmatprep.subr.mxu0 0.0
    %987 = vmatpush1.msra.mxu0 0.0
    %988 = vmatprep.subr.mxu0 0.0
    %989 = vmatpush1.msra.mxu0 0.0
    %990 = vmatprep.subr.mxu0 0.0
    %991 = vmatpush1.msra.mxu0 0.0
    %992 = vmatprep.subr.mxu0 0.0
    %993 = vmatpush1.msra.mxu0 0.0
    %994 = vmatprep.subr.mxu0 0.0
    %995 = vmatpush1.msra.mxu0 %v271
    %996 = vmatprep.subr.mxu0 0.0
    %997 = vmatpush1.msra.mxu0 %v270
    %998 = vmatprep.subr.mxu0 0.0
    %999 = vmatpush1.msra.mxu0 %v269
    %1000 = vmatprep.subr.mxu0 0.0
    %1001 = vmatpush1.msra.mxu0 %v268
    %1002 = vmatprep.subr.mxu0 0.0
    %1003 = vmatpush2.msra.mxu0 0.0
    %1004 = vmatprep.subr.mxu0 0.0
    %1005 = vmatpush2.msra.mxu0 0.0
    %1006 = vmatprep.subr.mxu0 0.0
    %1007 = vmatpush2.msra.mxu0 0.0
    %1008 = vmatprep.subr.mxu0 0.0
    %1009 = vmatpush2.msra.mxu0 0.0
    %1010 = vmatprep.subr.mxu0 0.0
    %1011 = vmatpush2.msra.mxu0 0.0
    %1012 = vmatprep.subr.mxu0 0.0
    %1013 = vmatpush2.msra.mxu0 0.0
    %1014 = vmatprep.subr.mxu0 0.0
    %1015 = vmatpush2.msra.mxu0 0.0
    %1016 = vmatprep.subr.mxu0 0.0
    %1017 = vmatpush2.msra.mxu0 0.0
    %1018 = vmatprep.subr.mxu0 0.0
    %1019 = vmatpush2.msra.mxu0 0.0
    %1020 = vmatprep.subr.mxu0 0.0
    %1021 = vmatpush2.msra.mxu0 0.0
    %1022 = vmatprep.subr.mxu0 0.0
    %1023 = vmatpush2.msra.mxu0 0.0
    %1024 = vmatprep.subr.mxu0 0.0
    %1025 = vmatpush2.msra.mxu0 0.0
    %1026 = vmatprep.subr.mxu0 0.0
    %1027 = vmatpush2.msra.mxu0 0.0
    %1028 = vmatprep.subr.mxu0 0.0
    %1029 = vmatpush2.msra.mxu0 0.0
    %1030 = vmatprep.subr.mxu0 0.0
    %1031 = vmatpush2.msra.mxu0 0.0
    %1032 = vmatprep.subr.mxu0 0.0
    %1033 = vmatpush2.msra.mxu0 0.0
    %1034 = vmatprep.mubr.f32.mxu0 0.0
    %1035 = vmatmul.mubr.f32.gmra.mxu0 %v968
    %v1036 = vpop.f32.mrf.mxu0
    %v1037 = vadd.f32 0.0, %v1036
    %v1038 = vpop.f32.mrf.mxu0
    %1039 = vdwg.mxu0
    %v1040 = vadd.f32 %v964, %v1037
    %v1041 = vmul.f32 %v277, %v1040
    %v1042 = vtanh.pop %v1041
    %v1043 = vmul.f32 %v277, %v1042
    %v1044 = vadd.f32 %v1043, %v278
    %v1045 = vmul.f32 %v1044, %v957
    %1047 = vrot.lane.b32.xlu0 %v1044, 64
    %v1048 = vpop.permute.xlu0 %1047
    %v1050 = vmul.f32 %v1044, %v1048
    %1052 = vrot.lane.b32.xlu0 %v1050, 32
    %v1053 = vpop.permute.xlu0 %1052
    %v1055 = vadd.f32 %v1045, %v1053
    %v1056 = vtanh.pop %v1055
    %1058 = vrot.lane.b32.xlu0 %v1056, 64
    %v1059 = vpop.permute.xlu0 %1058
    %v1061 = vmul.f32 %v1044, %v1059
    %v1062 = vld [vmem:[#allocation8] sm:$0xff]
    %v1063 = vld [vmem:[#allocation8 + $0x8] sm:$0xff]
    %v1064 = vld [vmem:[#allocation8 + $0x10] sm:$0xff]
    %v1065 = vld [vmem:[#allocation8 + $0x18] sm:$0xff]
    %v1066 = vld [vmem:[#allocation10] sm:$0x1]
    %v1068 = vlaneseq
    %v1069 = vshrl.u32 %v1068, 7
    %v1070 = vsub.s32 0, %v1069
    %v1071 = vrot.slane %v1066, %v1070
    %1074 = vrot.lane.b32.xlu0 %v1061, 32
    %v1075 = vpop.permute.xlu0 %1074
    %v1076 = vsel %vm280, %v1075, 0
    %1078 = vmatprep.subr.mxu0 0.0
    %1079 = vmatpush1.msra.mxu0 0.0
    %1080 = vmatprep.subr.mxu0 0.0
    %1081 = vmatpush1.msra.mxu0 0.0
    %1082 = vmatprep.subr.mxu0 0.0
    %1083 = vmatpush1.msra.mxu0 0.0
    %1084 = vmatprep.subr.mxu0 0.0
    %1085 = vmatpush1.msra.mxu0 0.0
    %1086 = vmatprep.subr.mxu0 0.0
    %1087 = vmatpush1.msra.mxu0 0.0
    %1088 = vmatprep.subr.mxu0 0.0
    %1089 = vmatpush1.msra.mxu0 0.0
    %1090 = vmatprep.subr.mxu0 0.0
    %1091 = vmatpush1.msra.mxu0 0.0
    %1092 = vmatprep.subr.mxu0 0.0
    %1093 = vmatpush1.msra.mxu0 0.0
    %1094 = vmatprep.subr.mxu0 0.0
    %1095 = vmatpush1.msra.mxu0 0.0
    %1096 = vmatprep.subr.mxu0 0.0
    %1097 = vmatpush1.msra.mxu0 0.0
    %1098 = vmatprep.subr.mxu0 0.0
    %1099 = vmatpush1.msra.mxu0 0.0
    %1100 = vmatprep.subr.mxu0 0.0
    %1101 = vmatpush1.msra.mxu0 0.0
    %1102 = vmatprep.subr.mxu0 0.0
    %1103 = vmatpush1.msra.mxu0 %v1065
    %1104 = vmatprep.subr.mxu0 0.0
    %1105 = vmatpush1.msra.mxu0 %v1064
    %1106 = vmatprep.subr.mxu0 0.0
    %1107 = vmatpush1.msra.mxu0 %v1063
    %1108 = vmatprep.subr.mxu0 0.0
    %1109 = vmatpush1.msra.mxu0 %v1062
    %1110 = vmatprep.subr.mxu0 0.0
    %1111 = vmatpush2.msra.mxu0 0.0
    %1112 = vmatprep.subr.mxu0 0.0
    %1113 = vmatpush2.msra.mxu0 0.0
    %1114 = vmatprep.subr.mxu0 0.0
    %1115 = vmatpush2.msra.mxu0 0.0
    %1116 = vmatprep.subr.mxu0 0.0
    %1117 = vmatpush2.msra.mxu0 0.0
    %1118 = vmatprep.subr.mxu0 0.0
    %1119 = vmatpush2.msra.mxu0 0.0
    %1120 = vmatprep.subr.mxu0 0.0
    %1121 = vmatpush2.msra.mxu0 0.0
    %1122 = vmatprep.subr.mxu0 0.0
    %1123 = vmatpush2.msra.mxu0 0.0
    %1124 = vmatprep.subr.mxu0 0.0
    %1125 = vmatpush2.msra.mxu0 0.0
    %1126 = vmatprep.subr.mxu0 0.0
    %1127 = vmatpush2.msra.mxu0 0.0
    %1128 = vmatprep.subr.mxu0 0.0
    %1129 = vmatpush2.msra.mxu0 0.0
    %1130 = vmatprep.subr.mxu0 0.0
    %1131 = vmatpush2.msra.mxu0 0.0
    %1132 = vmatprep.subr.mxu0 0.0
    %1133 = vmatpush2.msra.mxu0 0.0
    %1134 = vmatprep.subr.mxu0 0.0
    %1135 = vmatpush2.msra.mxu0 0.0
    %1136 = vmatprep.subr.mxu0 0.0
    %1137 = vmatpush2.msra.mxu0 0.0
    %1138 = vmatprep.subr.mxu0 0.0
    %1139 = vmatpush2.msra.mxu0 0.0
    %1140 = vmatprep.subr.mxu0 0.0
    %1141 = vmatpush2.msra.mxu0 0.0
    %1142 = vmatprep.mubr.f32.mxu0 0.0
    %1143 = vmatmul.mubr.f32.gmra.mxu0 %v1076
    %v1144 = vpop.f32.mrf.mxu0
    %v1145 = vadd.f32 %v1071, %v1144
    %v1146 = vpop.f32.mrf.mxu0
    %1147 = vdwg.mxu0
    %v1148 = vmax.f32 %v1145, 0.0
    %v1149 = vld [vmem:[#allocation11] sm:$0xff]
    %v1150 = vld [vmem:[#allocation11 + $0x8] sm:$0xff]
    %v1151 = vld [vmem:[#allocation11 + $0x10] sm:$0xff]
    %v1152 = vld [vmem:[#allocation11 + $0x18] sm:$0xff]
    %v1153 = vld [vmem:[#allocation11 + $0x20] sm:$0xff]
    %v1154 = vld [vmem:[#allocation11 + $0x28] sm:$0xff]
    %v1155 = vld [vmem:[#allocation11 + $0x30] sm:$0xff]
    %v1156 = vld [vmem:[#allocation11 + $0x38] sm:$0xff]
    %v1157 = vld [vmem:[#allocation11 + $0x40] sm:$0xff]
    %v1158 = vld [vmem:[#allocation11 + $0x48] sm:$0xff]
    %v1159 = vld [vmem:[#allocation11 + $0x50] sm:$0xff]
    %v1160 = vld [vmem:[#allocation11 + $0x58] sm:$0xff]
    %v1161 = vld [vmem:[#allocation11 + $0x60] sm:$0xff]
    %v1162 = vld [vmem:[#allocation11 + $0x68] sm:$0xff]
    %v1163 = vld [vmem:[#allocation11 + $0x70] sm:$0xff]
    %v1164 = vld [vmem:[#allocation11 + $0x78] sm:$0xff]
    %v1165 = vld [vmem:[#allocation13] sm:$0x1]
    %v1167 = vlaneseq
    %v1168 = vshrl.u32 %v1167, 7
    %v1169 = vsub.s32 0, %v1168
    %v1170 = vrot.slane %v1165, %v1169
    %1172 = vmatprep.subr.mxu0 0.0
    %1173 = vmatpush1.msra.mxu0 %v1164
    %1174 = vmatprep.subr.mxu0 0.0
    %1175 = vmatpush1.msra.mxu0 %v1163
    %1176 = vmatprep.subr.mxu0 0.0
    %1177 = vmatpush1.msra.mxu0 %v1162
    %1178 = vmatprep.subr.mxu0 0.0
    %1179 = vmatpush1.msra.mxu0 %v1161
    %1180 = vmatprep.subr.mxu0 0.0
    %1181 = vmatpush1.msra.mxu0 %v1160
    %1182 = vmatprep.subr.mxu0 0.0
    %1183 = vmatpush1.msra.mxu0 %v1159
    %1184 = vmatprep.subr.mxu0 0.0
    %1185 = vmatpush1.msra.mxu0 %v1158
    %1186 = vmatprep.subr.mxu0 0.0
    %1187 = vmatpush1.msra.mxu0 %v1157
    %1188 = vmatprep.subr.mxu0 0.0
    %1189 = vmatpush1.msra.mxu0 %v1156
    %1190 = vmatprep.subr.mxu0 0.0
    %1191 = vmatpush1.msra.mxu0 %v1155
    %1192 = vmatprep.subr.mxu0 0.0
    %1193 = vmatpush1.msra.mxu0 %v1154
    %1194 = vmatprep.subr.mxu0 0.0
    %1195 = vmatpush1.msra.mxu0 %v1153
    %1196 = vmatprep.subr.mxu0 0.0
    %1197 = vmatpush1.msra.mxu0 %v1152
    %1198 = vmatprep.subr.mxu0 0.0
    %1199 = vmatpush1.msra.mxu0 %v1151
    %1200 = vmatprep.subr.mxu0 0.0
    %1201 = vmatpush1.msra.mxu0 %v1150
    %1202 = vmatprep.subr.mxu0 0.0
    %1203 = vmatpush1.msra.mxu0 %v1149
    %1204 = vmatprep.subr.mxu0 0.0
    %1205 = vmatpush2.msra.mxu0 0.0
    %1206 = vmatprep.subr.mxu0 0.0
    %1207 = vmatpush2.msra.mxu0 0.0
    %1208 = vmatprep.subr.mxu0 0.0
    %1209 = vmatpush2.msra.mxu0 0.0
    %1210 = vmatprep.subr.mxu0 0.0
    %1211 = vmatpush2.msra.mxu0 0.0
    %1212 = vmatprep.subr.mxu0 0.0
    %1213 = vmatpush2.msra.mxu0 0.0
    %1214 = vmatprep.subr.mxu0 0.0
    %1215 = vmatpush2.msra.mxu0 0.0
    %1216 = vmatprep.subr.mxu0 0.0
    %1217 = vmatpush2.msra.mxu0 0.0
    %1218 = vmatprep.subr.mxu0 0.0
    %1219 = vmatpush2.msra.mxu0 0.0
    %1220 = vmatprep.subr.mxu0 0.0
    %1221 = vmatpush2.msra.mxu0 0.0
    %1222 = vmatprep.subr.mxu0 0.0
    %1223 = vmatpush2.msra.mxu0 0.0
    %1224 = vmatprep.subr.mxu0 0.0
    %1225 = vmatpush2.msra.mxu0 0.0
    %1226 = vmatprep.subr.mxu0 0.0
    %1227 = vmatpush2.msra.mxu0 0.0
    %1228 = vmatprep.subr.mxu0 0.0
    %1229 = vmatpush2.msra.mxu0 0.0
    %1230 = vmatprep.subr.mxu0 0.0
    %1231 = vmatpush2.msra.mxu0 0.0
    %1232 = vmatprep.subr.mxu0 0.0
    %1233 = vmatpush2.msra.mxu0 0.0
    %1234 = vmatprep.subr.mxu0 0.0
    %1235 = vmatpush2.msra.mxu0 0.0
    %1236 = vmatprep.mubr.f32.mxu0 0.0
    %1237 = vmatmul.mubr.f32.gmra.mxu0 %v1148
    %v1238 = vpop.f32.mrf.mxu0
    %v1239 = vadd.f32 %v1170, %v1238
    %v1240 = vpop.f32.mrf.mxu0
    %1241 = vdwg.mxu0
    %v1242 = vmax.f32 %v1239, 0.0
    %v1243 = vld [vmem:[%s8] sm:$0xff]
    %v1244 = vld [vmem:[%s8 + $0x8] sm:$0xff]
    %v1245 = vld [vmem:[%s8 + $0x10] sm:$0xff]
    %v1246 = vld [vmem:[%s8 + $0x18] sm:$0xff]
    %v1247 = vld [vmem:[%s8 + $0x20] sm:$0xff]
    %v1248 = vld [vmem:[%s8 + $0x28] sm:$0xff]
    %v1249 = vld [vmem:[%s8 + $0x30] sm:$0xff]
    %v1250 = vld [vmem:[%s8 + $0x38] sm:$0xff]
    %v1251 = vld [vmem:[%s8 + $0x40] sm:$0xff]
    %v1252 = vld [vmem:[%s8 + $0x48] sm:$0xff]
    %v1253 = vld [vmem:[%s8 + $0x50] sm:$0xff]
    %v1254 = vld [vmem:[%s8 + $0x58] sm:$0xff]
    %v1255 = vld [vmem:[%s8 + $0x60] sm:$0xff]
    %v1256 = vld [vmem:[%s8 + $0x68] sm:$0xff]
    %v1257 = vld [vmem:[%s8 + $0x70] sm:$0xff]
    %v1258 = vld [vmem:[%s8 + $0x78] sm:$0xff]
    %v1259 = vld [vmem:[%s9] sm:$0x1]
    %v1261 = vlaneseq
    %v1262 = vshrl.u32 %v1261, 7
    %v1263 = vsub.s32 0, %v1262
    %v1264 = vrot.slane %v1259, %v1263
    %1266 = vmatprep.subr.mxu0 0.0
    %1267 = vmatpush1.msra.mxu0 %v1258
    %1268 = vmatprep.subr.mxu0 0.0
    %1269 = vmatpush1.msra.mxu0 %v1257
    %1270 = vmatprep.subr.mxu0 0.0
    %1271 = vmatpush1.msra.mxu0 %v1256
    %1272 = vmatprep.subr.mxu0 0.0
    %1273 = vmatpush1.msra.mxu0 %v1255
    %1274 = vmatprep.subr.mxu0 0.0
    %1275 = vmatpush1.msra.mxu0 %v1254
    %1276 = vmatprep.subr.mxu0 0.0
    %1277 = vmatpush1.msra.mxu0 %v1253
    %1278 = vmatprep.subr.mxu0 0.0
    %1279 = vmatpush1.msra.mxu0 %v1252
    %1280 = vmatprep.subr.mxu0 0.0
    %1281 = vmatpush1.msra.mxu0 %v1251
    %1282 = vmatprep.subr.mxu0 0.0
    %1283 = vmatpush1.msra.mxu0 %v1250
    %1284 = vmatprep.subr.mxu0 0.0
    %1285 = vmatpush1.msra.mxu0 %v1249
    %1286 = vmatprep.subr.mxu0 0.0
    %1287 = vmatpush1.msra.mxu0 %v1248
    %1288 = vmatprep.subr.mxu0 0.0
    %1289 = vmatpush1.msra.mxu0 %v1247
    %1290 = vmatprep.subr.mxu0 0.0
    %1291 = vmatpush1.msra.mxu0 %v1246
    %1292 = vmatprep.subr.mxu0 0.0
    %1293 = vmatpush1.msra.mxu0 %v1245
    %1294 = vmatprep.subr.mxu0 0.0
    %1295 = vmatpush1.msra.mxu0 %v1244
    %1296 = vmatprep.subr.mxu0 0.0
    %1297 = vmatpush1.msra.mxu0 %v1243
    %1298 = vmatprep.subr.mxu0 0.0
    %1299 = vmatpush2.msra.mxu0 0.0
    %1300 = vmatprep.subr.mxu0 0.0
    %1301 = vmatpush2.msra.mxu0 0.0
    %1302 = vmatprep.subr.mxu0 0.0
    %1303 = vmatpush2.msra.mxu0 0.0
    %1304 = vmatprep.subr.mxu0 0.0
    %1305 = vmatpush2.msra.mxu0 0.0
    %1306 = vmatprep.subr.mxu0 0.0
    %1307 = vmatpush2.msra.mxu0 0.0
    %1308 = vmatprep.subr.mxu0 0.0
    %1309 = vmatpush2.msra.mxu0 0.0
    %1310 = vmatprep.subr.mxu0 0.0
    %1311 = vmatpush2.msra.mxu0 0.0
    %1312 = vmatprep.subr.mxu0 0.0
    %1313 = vmatpush2.msra.mxu0 0.0
    %1314 = vmatprep.subr.mxu0 0.0
    %1315 = vmatpush2.msra.mxu0 0.0
    %1316 = vmatprep.subr.mxu0 0.0
    %1317 = vmatpush2.msra.mxu0 0.0
    %1318 = vmatprep.subr.mxu0 0.0
    %1319 = vmatpush2.msra.mxu0 0.0
    %1320 = vmatprep.subr.mxu0 0.0
    %1321 = vmatpush2.msra.mxu0 0.0
    %1322 = vmatprep.subr.mxu0 0.0
    %1323 = vmatpush2.msra.mxu0 0.0
    %1324 = vmatprep.subr.mxu0 0.0
    %1325 = vmatpush2.msra.mxu0 0.0
    %1326 = vmatprep.subr.mxu0 0.0
    %1327 = vmatpush2.msra.mxu0 0.0
    %1328 = vmatprep.subr.mxu0 0.0
    %1329 = vmatpush2.msra.mxu0 0.0
    %1330 = vmatprep.mubr.f32.mxu0 0.0
    %1331 = vmatmul.mubr.f32.gmra.mxu0 %v1242
    %v1332 = vpop.f32.mrf.mxu0
    %v1333 = vadd.f32 %v1264, %v1332
    %v1334 = vpop.f32.mrf.mxu0
    %1335 = vdwg.mxu0
    %1336 = vst [vmem:[%s10] sm:$0xff] %v1333
    // Predicated region
    $region70: #{forward.1} parent=1 // pred_check
      _
    $region71: #{forward.1} parent=1 // pred_check_branch
      %1338 = sbr.rel (0) target = $region73
    $region72: #{forward.1} parent=1 // pred_region
      _
    $region73: #{forward.1} parent=1 // pred_fallthru
      _
    // Predicated region
    $region74: #{forward.1} parent=1 // pred_check
      _
    $region75: #{forward.1} parent=1 // pred_check_branch
      %1340 = sbr.rel (0) target = $region77
    $region76: #{forward.1} parent=1 // pred_region
      _
    $region77: #{forward.1} parent=1 // pred_fallthru
      _
    %1341 = vsyncpa [#allocation4], 1
    %1342 = vsyncpa [#allocation6], 1
    %1343 = vsyncpa [#allocation9], 1
    %1344 = vsyncpa [#allocation12], 1

</llo_original>
